<compile_context>
chip_gen: v7x
topology: tpu7x:2x2x1
jax: 0.10.0
libtpu: 0.0.40
codegen_flags: <defaults>
</compile_context>

<pallas_src>
import functools
import math

import jax
import jax.numpy as jnp
from jax import lax
from jax.experimental import pallas as pl
from jax.experimental.pallas import tpu as pltpu


def _attn_kernel(tq, approx_recip,
                 x_ref,
                 wq_ref, wk_ref, wv_ref,
                 bq_ref, bk_ref, bv_ref,
                 wo_ref, bo_ref,
                 o_ref,
                 k_scratch, v_scratch):
    qi = pl.program_id(1)

    # Build resident K / V for the whole sequence once per batch element; they
    # stay in VMEM scratch across all query tiles of this batch element.
    @pl.when(qi == 0)
    def _():
        xf = x_ref[0].astype(wk_ref.dtype)                               # (S, C)
        k = jnp.dot(xf, wk_ref[...], preferred_element_type=jnp.float32) + bk_ref[...]
        v = jnp.dot(xf, wv_ref[...], preferred_element_type=jnp.float32) + bv_ref[...]
        k_scratch[...] = k.astype(k_scratch.dtype)
        v_scratch[...] = v.astype(v_scratch.dtype)

    # Query strip sliced from the resident full-sequence block (no second HBM
    # stream for x). Used both as the Q-projection input and as the residual.
    start = pl.multiple_of(qi * tq, tq)
    xq_res = x_ref[0, pl.ds(start, tq), :]                               # (TQ, C) f32
    xq = xq_res.astype(wq_ref.dtype)

    # Q projection. 1/sqrt(C) is pre-folded into wq/bq in the wrapper, so no
    # in-kernel score scaling on the VALU.
    q = jnp.dot(xq, wq_ref[...], preferred_element_type=jnp.float32) + bq_ref[...]

    # scores = Q @ K^T, contracting the last dims of both operands directly
    # (no K transpose / relayout).
    scores = lax.dot_general(
        q.astype(k_scratch.dtype), k_scratch[...],
        dimension_numbers=(((1,), (1,)), ((), ())),
        preferred_element_type=jnp.float32)                              # (TQ, S)

    # Numerically stable softmax over the key axis (f32 throughout).
    m = jnp.max(scores, axis=-1, keepdims=True)
    e = jnp.exp(scores - m)
    denom = jnp.sum(e, axis=-1, keepdims=True)
    p = e * pl.reciprocal(denom, approx=approx_recip)                    # EUP recip

    attn = jnp.dot(p.astype(v_scratch.dtype), v_scratch[...],
                   preferred_element_type=jnp.float32)                   # (TQ, C)

    out = jnp.dot(attn.astype(wo_ref.dtype), wo_ref[...],
                  preferred_element_type=jnp.float32) + bo_ref[...]

    # Residual add (residue == x because groupnorm is not applied in forward()).
    o_ref[0] = (out + xq_res).astype(o_ref.dtype)


def _pick_q_tile(s, target):
    """Largest divisor of s that is <= target (preferring multiples of 8)."""
    if s <= target:
        return s
    for t in range(target, 7, -1):
        if s % t == 0 and t % 8 == 0:
            return t
    for t in range(target, 0, -1):
        if s % t == 0:
            return t
    return s


def _const_spec(shape, buffers):
    """BlockSpec with a constant index_map; single-buffered when supported."""
    idx = lambda b, q: (0,) * len(shape)
    if buffers is not None:
        try:
            return pl.BlockSpec(shape, idx, pipeline_mode=pl.Buffered(buffers))
        except TypeError:  # older jax without pipeline_mode on BlockSpec
            pass
    return pl.BlockSpec(shape, idx)


def vae_attention_block(x_nchw, w_in, b_in, w_out, b_out,
                        *, compute_dtype=jnp.bfloat16, q_tile=256,
                        approx_recip=True):
    """x_nchw: (N, C, H, W) float32.  Returns (N, C, H, W) float32.

    compute_dtype: dtype fed to the MXU. bfloat16 (default) is the fast path on
      all of v5e/v6e/v7x; accumulation, softmax math and the residual add are
      always float32. Use float32 only for bit-tight validation (2-4x slower).
    q_tile: query-tile rows. 256 is safe everywhere; 384-512 buys a few percent
      on v5e/v6e (128 MiB VMEM); drop to 128 on v7x if VMEM is tight.
    approx_recip: EUP approximate reciprocal for the softmax denominator
      (rel err ~2^-12, effectively free). Set False for exact-reference CI.
    """
    n, c, h, w = x_nchw.shape
    s = h * w
    tq = _pick_q_tile(s, q_tile)
    nq = s // tq

    # (N, C, H, W) -> (N, C, S) -> (N, S, C)  (channels-last -> fast lane axis)
    x_seq = jnp.transpose(x_nchw.reshape(n, c, s), (0, 2, 1)).astype(jnp.float32)

    # Pre-transpose weights (one-time, in HBM), pre-split the QKV slab, and
    # fold the 1/sqrt(C) softmax scale into the Q projection.
    scale = 1.0 / math.sqrt(c)
    w_in_t = w_in.T                                                   # (C, 3C)
    wq = (w_in_t[:, 0 * c:1 * c] * scale).astype(compute_dtype)       # (C, C)
    wk = w_in_t[:, 1 * c:2 * c].astype(compute_dtype)                 # (C, C)
    wv = w_in_t[:, 2 * c:3 * c].astype(compute_dtype)                 # (C, C)
    bq = (b_in[0 * c:1 * c] * scale).reshape(1, c).astype(jnp.float32)
    bk = b_in[1 * c:2 * c].reshape(1, c).astype(jnp.float32)
    bv = b_in[2 * c:3 * c].reshape(1, c).astype(jnp.float32)
    wo = w_out.T.astype(compute_dtype)                                # (C, C)
    bo = b_out.reshape(1, c).astype(jnp.float32)

    kernel = functools.partial(_attn_kernel, tq, bool(approx_recip))

    # Advisory cost estimate: 4 projections + QK^T + PV; x read + out write +
    # weights (biases negligible).
    wbytes = jnp.dtype(compute_dtype).itemsize
    flops = int(n * (8 * s * c * c + 4 * s * s * c))
    transcendentals = int(n * s * s)
    bytes_accessed = int(n * s * c * 4      # x read (single stream)
                         + n * s * c * 4    # output write
                         + 4 * c * c * wbytes)

    out_seq = pl.pallas_call(
        kernel,
        out_shape=jax.ShapeDtypeStruct((n, s, c), jnp.float32),
        grid_spec=pltpu.PrefetchScalarGridSpec(
            num_scalar_prefetch=0,
            grid=(n, nq),
            in_specs=[
                # Full-sequence x block; index constant across q tiles so it is
                # only re-DMA'd per batch element. Source for the resident K/V
                # build, the per-tile query strip AND the residual.
                pl.BlockSpec((1, s, c), lambda b, q: (b, 0, 0)),
                # Constant-index weight / bias blocks: single-buffered.
                _const_spec((c, c), 1),                               # wq (pre-scaled)
                _const_spec((c, c), 1),                               # wk
                _const_spec((c, c), 1),                               # wv
                _const_spec((1, c), 1),                               # bq (pre-scaled)
                _const_spec((1, c), 1),                               # bk
                _const_spec((1, c), 1),                               # bv
                _const_spec((c, c), 1),                               # wo
                _const_spec((1, c), 1),                               # bo
            ],
            out_specs=pl.BlockSpec((1, tq, c), lambda b, q: (b, q, 0)),
            scratch_shapes=[
                pltpu.VMEM((s, c), compute_dtype),                    # resident K
                pltpu.VMEM((s, c), compute_dtype),                    # resident V
            ],
        ),
        compiler_params=pltpu.CompilerParams(
            # q axis must be "arbitrary": K/V scratch written at q==0 is reused
            # by later q tiles of the same batch element.
            dimension_semantics=("parallel", "arbitrary"),
            # 56 MiB: fits the bf16 prod config and leaves headroom for
            # compiler-internal scratch under v7x's 64 MiB physical VMEM.
            vmem_limit_bytes=56 * 1024 * 1024,
        ),
        cost_estimate=pl.CostEstimate(
            flops=flops, transcendentals=transcendentals,
            bytes_accessed=bytes_accessed),
    )(x_seq, wq, wk, wv, bq, bk, bv, wo, bo)

    # (N, S, C) -> (N, C, S) -> (N, C, H, W)
    return jnp.transpose(out_seq, (0, 2, 1)).reshape(n, c, h, w)


def _reference(x_nchw, w_in, b_in, w_out, b_out):
    """Pure-JAX reference of the exact PyTorch forward (no groupnorm applied)."""
    n, c, h, w = x_nchw.shape
    s = h * w
    xs = jnp.transpose(x_nchw.reshape(n, c, s), (0, 2, 1))            # (N, S, C)
    qkv = jnp.einsum("nsc,dc->nsd", xs, w_in) + b_in                  # (N, S, 3C)
    q, k, v = qkv[..., :c], qkv[..., c:2 * c], qkv[..., 2 * c:]
    sc = jnp.einsum("nqc,nkc->nqk", q, k) / math.sqrt(c)
    p = jax.nn.softmax(sc, axis=-1)
    attn = jnp.einsum("nqk,nkc->nqc", p, v)
    out = jnp.einsum("nsc,dc->nsd", attn, w_out) + b_out
    out = out + xs
    return jnp.transpose(out, (0, 2, 1)).reshape(n, c, h, w)


if __name__ == "__main__":
    # Small shapes consistent with the module (channels must be a multiple of
    # 32 because of GroupNorm(32, channels) in __init__). S = 256 with
    # q_tile=128 exercises the multi-query-tile path + resident K/V scratch.
    N, C, H, W = 2, 64, 16, 16

    key = jax.random.PRNGKey(0)
    kx, k1, k2, k3, k4 = jax.random.split(key, 5)

    x = jax.random.normal(kx, (N, C, H, W), dtype=jnp.float32)

    # PyTorch Linear default init: U(-1/sqrt(fan_in), 1/sqrt(fan_in))
    bound = 1.0 / math.sqrt(C)
    w_in = jax.random.uniform(k1, (3 * C, C), jnp.float32, -bound, bound)   # in_proj weight
    b_in = jax.random.uniform(k2, (3 * C,), jnp.float32, -bound, bound)     # in_proj bias
    w_out = jax.random.uniform(k3, (C, C), jnp.float32, -bound, bound)      # out_proj weight
    b_out = jax.random.uniform(k4, (C,), jnp.float32, -bound, bound)        # out_proj bias

    # GroupNorm params exist in __init__ but are unused by the given forward().
    gn_gamma = jnp.ones((C,), jnp.float32)
    gn_beta = jnp.zeros((C,), jnp.float32)

    ref = _reference(x, w_in, b_in, w_out, b_out)

    # Exact CI path: f32 MXU + exact reciprocal, tight tolerance.
    out_f32 = vae_attention_block(x, w_in, b_in, w_out, b_out,
                                  compute_dtype=jnp.float32, q_tile=128,
                                  approx_recip=False)
    out_f32 = jax.block_until_ready(out_f32)
    assert out_f32.shape == x.shape and out_f32.dtype == jnp.float32
    assert jnp.allclose(out_f32, ref, atol=1e-4, rtol=1e-4), "f32 mismatch vs reference"

    # Default fast path: bf16 MXU operands, f32 accum/softmax, EUP approx recip.
    out_bf16 = vae_attention_block(x, w_in, b_in, w_out, b_out, q_tile=128)
    out_bf16 = jax.block_until_ready(out_bf16)
    assert out_bf16.shape == x.shape and out_bf16.dtype == jnp.float32
    assert jnp.allclose(out_bf16, ref, atol=5e-2, rtol=5e-2), "bf16 mismatch vs reference"

    print("KERNEL_OK")
</pallas_src>

<mosaic_0001>
module attributes {stable_mosaic.version = 11 : i64} {
  func.func @_attn_kernel(%arg0: i32, %arg1: i32, %arg2: memref<1x256x64xf32, #tpu.memory_space<vmem>>, %arg3: memref<64x64xf32, #tpu.memory_space<vmem>>, %arg4: memref<64x64xf32, #tpu.memory_space<vmem>>, %arg5: memref<64x64xf32, #tpu.memory_space<vmem>>, %arg6: memref<1x64xf32, #tpu.memory_space<vmem>>, %arg7: memref<1x64xf32, #tpu.memory_space<vmem>>, %arg8: memref<1x64xf32, #tpu.memory_space<vmem>>, %arg9: memref<64x64xf32, #tpu.memory_space<vmem>>, %arg10: memref<1x64xf32, #tpu.memory_space<vmem>>, %arg11: memref<1x128x64xf32, #tpu.memory_space<vmem>>, %arg12: memref<256x64xf32, #tpu.memory_space<vmem>>, %arg13: memref<256x64xf32, #tpu.memory_space<vmem>>) attributes {dimension_semantics = [#tpu.dimension_semantics<parallel>, #tpu.dimension_semantics<arbitrary>], iteration_bounds = array<i64: 2, 2>, scalar_prefetch = 0 : i64, scratch_operands = 2 : i64, tpu.core_type = #tpu.core_type<tc>, window_params = [{transform_indices = @transform_0, window_bounds = array<i64: 1, 256, 64>}, {pipeline_mode = #tpu.pipeline_mode<synchronous>, transform_indices = @transform_1, window_bounds = array<i64: 64, 64>}, {pipeline_mode = #tpu.pipeline_mode<synchronous>, transform_indices = @transform_2, window_bounds = array<i64: 64, 64>}, {pipeline_mode = #tpu.pipeline_mode<synchronous>, transform_indices = @transform_3, window_bounds = array<i64: 64, 64>}, {pipeline_mode = #tpu.pipeline_mode<synchronous>, transform_indices = @transform_4, window_bounds = array<i64: 1, 64>}, {pipeline_mode = #tpu.pipeline_mode<synchronous>, transform_indices = @transform_5, window_bounds = array<i64: 1, 64>}, {pipeline_mode = #tpu.pipeline_mode<synchronous>, transform_indices = @transform_6, window_bounds = array<i64: 1, 64>}, {pipeline_mode = #tpu.pipeline_mode<synchronous>, transform_indices = @transform_7, window_bounds = array<i64: 64, 64>}, {pipeline_mode = #tpu.pipeline_mode<synchronous>, transform_indices = @transform_8, window_bounds = array<i64: 1, 64>}, {transform_indices = @transform_9, window_bounds = array<i64: 1, 128, 64>}]} {
    %c0_i32 = arith.constant 0 : i32
    %0 = arith.cmpi eq, %arg1, %c0_i32 : i32
    %1 = arith.extui %0 : i1 to i32
    %c0_i32_0 = arith.constant 0 : i32
    %2 = arith.cmpi ne, %1, %c0_i32_0 : i32
    scf.if %2 {
      %c0_22 = arith.constant 0 : index
      %c0_23 = arith.constant 0 : index
      %c0_24 = arith.constant 0 : index
      %36 = vector.load %arg2[%c0_22, %c0_23, %c0_24] : memref<1x256x64xf32, #tpu.memory_space<vmem>>, vector<1x256x64xf32>
      %37 = vector.shape_cast %36 : vector<1x256x64xf32> to vector<256x64xf32>
      %c0_25 = arith.constant 0 : index
      %c0_26 = arith.constant 0 : index
      %38 = vector.load %arg4[%c0_25, %c0_26] : memref<64x64xf32, #tpu.memory_space<vmem>>, vector<64x64xf32>
      %cst_27 = arith.constant dense<0.000000e+00> : vector<256x64xf32>
      %39 = tpu.matmul %37, %38, %cst_27 {dimension_numbers = #tpu.dot_dimension_numbers<[1], [0], [0], [1], [0, 0, 1, 1], [], []>} : vector<256x64xf32>, vector<64x64xf32>, vector<256x64xf32> -> vector<256x64xf32>
      %c0_28 = arith.constant 0 : index
      %c0_29 = arith.constant 0 : index
      %40 = vector.load %arg7[%c0_28, %c0_29] : memref<1x64xf32, #tpu.memory_space<vmem>>, vector<1x64xf32>
      %41 = vector.broadcast %40 : vector<1x64xf32> to vector<256x64xf32>
      %42 = arith.addf %39, %41 : vector<256x64xf32>
      %c0_30 = arith.constant 0 : index
      %c0_31 = arith.constant 0 : index
      %43 = vector.load %arg5[%c0_30, %c0_31] : memref<64x64xf32, #tpu.memory_space<vmem>>, vector<64x64xf32>
      %cst_32 = arith.constant dense<0.000000e+00> : vector<256x64xf32>
      %44 = tpu.matmul %37, %43, %cst_32 {dimension_numbers = #tpu.dot_dimension_numbers<[1], [0], [0], [1], [0, 0, 1, 1], [], []>} : vector<256x64xf32>, vector<64x64xf32>, vector<256x64xf32> -> vector<256x64xf32>
      %c0_33 = arith.constant 0 : index
      %c0_34 = arith.constant 0 : index
      %45 = vector.load %arg8[%c0_33, %c0_34] : memref<1x64xf32, #tpu.memory_space<vmem>>, vector<1x64xf32>
      %46 = vector.broadcast %45 : vector<1x64xf32> to vector<256x64xf32>
      %47 = arith.addf %44, %46 : vector<256x64xf32>
      %c0_35 = arith.constant 0 : index
      %c0_36 = arith.constant 0 : index
      %48 = vector.load %arg12[%c0_35, %c0_36] : memref<256x64xf32, #tpu.memory_space<vmem>>, vector<256x64xf32>
      tpu.vector_store %arg12[%c0_35, %c0_36], %42 {strides = array<i32>} : memref<256x64xf32, #tpu.memory_space<vmem>>, vector<256x64xf32>,
      %c0_37 = arith.constant 0 : index
      %c0_38 = arith.constant 0 : index
      %49 = vector.load %arg13[%c0_37, %c0_38] : memref<256x64xf32, #tpu.memory_space<vmem>>, vector<256x64xf32>
      tpu.vector_store %arg13[%c0_37, %c0_38], %47 {strides = array<i32>} : memref<256x64xf32, #tpu.memory_space<vmem>>, vector<256x64xf32>,
    } else {
    }
    %c128_i32 = arith.constant 128 : i32
    %3 = arith.muli %arg1, %c128_i32 : i32
    %4 = tpu.assume_multiple %3, 128 : i32
    %c0 = arith.constant 0 : index
    %5 = arith.index_cast %4 : i32 to index
    %c0_1 = arith.constant 0 : index
    %6 = vector.load %arg2[%c0, %5, %c0_1] : memref<1x256x64xf32, #tpu.memory_space<vmem>>, vector<1x128x64xf32>
    %7 = vector.shape_cast %6 : vector<1x128x64xf32> to vector<128x64xf32>
    %c0_2 = arith.constant 0 : index
    %c0_3 = arith.constant 0 : index
    %8 = vector.load %arg3[%c0_2, %c0_3] : memref<64x64xf32, #tpu.memory_space<vmem>>, vector<64x64xf32>
    %cst = arith.constant dense<0.000000e+00> : vector<128x64xf32>
    %9 = tpu.matmul %7, %8, %cst {dimension_numbers = #tpu.dot_dimension_numbers<[1], [0], [0], [1], [0, 0, 1, 1], [], []>} : vector<128x64xf32>, vector<64x64xf32>, vector<128x64xf32> -> vector<128x64xf32>
    %c0_4 = arith.constant 0 : index
    %c0_5 = arith.constant 0 : index
    %10 = vector.load %arg6[%c0_4, %c0_5] : memref<1x64xf32, #tpu.memory_space<vmem>>, vector<1x64xf32>
    %11 = vector.broadcast %10 : vector<1x64xf32> to vector<128x64xf32>
    %12 = arith.addf %9, %11 : vector<128x64xf32>
    %c0_6 = arith.constant 0 : index
    %c0_7 = arith.constant 0 : index
    %13 = vector.load %arg12[%c0_6, %c0_7] : memref<256x64xf32, #tpu.memory_space<vmem>>, vector<256x64xf32>
    %cst_8 = arith.constant dense<0.000000e+00> : vector<128x256xf32>
    %14 = tpu.matmul %12, %13, %cst_8 {dimension_numbers = #tpu.dot_dimension_numbers<[1], [1], [0], [0], [0, 0, 1, 0], [], []>} : vector<128x64xf32>, vector<256x64xf32>, vector<128x256xf32> -> vector<128x256xf32>
    %cst_9 = arith.constant dense<0xFF800000> : vector<128xf32>
    %15 = vector.multi_reduction <maximumf>, %14, %cst_9 [1] : vector<128x256xf32> to vector<128xf32>
    %16 = vector.shape_cast %15 : vector<128xf32> to vector<128x1xf32>
    %17 = vector.broadcast %16 : vector<128x1xf32> to vector<128x256xf32>
    %18 = arith.subf %14, %17 : vector<128x256xf32>
    %19 = math.exp %18 : vector<128x256xf32>
    %cst_10 = arith.constant dense<0.000000e+00> : vector<128xf32>
    %20 = vector.multi_reduction <add>, %19, %cst_10 [1] : vector<128x256xf32> to vector<128xf32>
    %21 = vector.shape_cast %20 : vector<128xf32> to vector<128x1xf32>
    %22 = tpu.reciprocal %21 : vector<128x1xf32> -> vector<128x1xf32>
    %23 = vector.broadcast %22 : vector<128x1xf32> to vector<128x256xf32>
    %24 = arith.mulf %19, %23 : vector<128x256xf32>
    %c0_11 = arith.constant 0 : index
    %c0_12 = arith.constant 0 : index
    %25 = vector.load %arg13[%c0_11, %c0_12] : memref<256x64xf32, #tpu.memory_space<vmem>>, vector<256x64xf32>
    %cst_13 = arith.constant dense<0.000000e+00> : vector<128x64xf32>
    %26 = tpu.matmul %24, %25, %cst_13 {dimension_numbers = #tpu.dot_dimension_numbers<[1], [0], [0], [1], [0, 0, 1, 1], [], []>} : vector<128x256xf32>, vector<256x64xf32>, vector<128x64xf32> -> vector<128x64xf32>
    %c0_14 = arith.constant 0 : index
    %c0_15 = arith.constant 0 : index
    %27 = vector.load %arg9[%c0_14, %c0_15] : memref<64x64xf32, #tpu.memory_space<vmem>>, vector<64x64xf32>
    %cst_16 = arith.constant dense<0.000000e+00> : vector<128x64xf32>
    %28 = tpu.matmul %26, %27, %cst_16 {dimension_numbers = #tpu.dot_dimension_numbers<[1], [0], [0], [1], [0, 0, 1, 1], [], []>} : vector<128x64xf32>, vector<64x64xf32>, vector<128x64xf32> -> vector<128x64xf32>
    %c0_17 = arith.constant 0 : index
    %c0_18 = arith.constant 0 : index
    %29 = vector.load %arg10[%c0_17, %c0_18] : memref<1x64xf32, #tpu.memory_space<vmem>>, vector<1x64xf32>
    %30 = vector.broadcast %29 : vector<1x64xf32> to vector<128x64xf32>
    %31 = arith.addf %28, %30 : vector<128x64xf32>
    %32 = arith.addf %31, %7 : vector<128x64xf32>
    %c0_19 = arith.constant 0 : index
    %c0_20 = arith.constant 0 : index
    %c0_21 = arith.constant 0 : index
    %33 = vector.load %arg11[%c0_19, %c0_20, %c0_21] : memref<1x128x64xf32, #tpu.memory_space<vmem>>, vector<1x128x64xf32>
    %34 = vector.shape_cast %33 : vector<1x128x64xf32> to vector<128x64xf32>
    %35 = vector.shape_cast %32 : vector<128x64xf32> to vector<1x128x64xf32>
    tpu.vector_store %arg11[%c0_19, %c0_20, %c0_21], %35 {strides = array<i32>} : memref<1x128x64xf32, #tpu.memory_space<vmem>>, vector<1x128x64xf32>,
    return
  }
  func.func @transform_0(%arg0: i32, %arg1: i32) -> (i32, i32, i32) {
    %c0_i32 = arith.constant 0 : i32
    %c0_i32_0 = arith.constant 0 : i32
    %c0_i32_1 = arith.constant 0 : i32
    return %arg0, %c0_i32, %c0_i32_0 : i32, i32, i32
  }
  func.func @transform_1(%arg0: i32, %arg1: i32) -> (i32, i32) {
    %c0_i32 = arith.constant 0 : i32
    %c0_i32_0 = arith.constant 0 : i32
    %c0_i32_1 = arith.constant 0 : i32
    return %c0_i32, %c0_i32_0 : i32, i32
  }
  func.func @transform_2(%arg0: i32, %arg1: i32) -> (i32, i32) {
    %c0_i32 = arith.constant 0 : i32
    %c0_i32_0 = arith.constant 0 : i32
    %c0_i32_1 = arith.constant 0 : i32
    return %c0_i32, %c0_i32_0 : i32, i32
  }
  func.func @transform_3(%arg0: i32, %arg1: i32) -> (i32, i32) {
    %c0_i32 = arith.constant 0 : i32
    %c0_i32_0 = arith.constant 0 : i32
    %c0_i32_1 = arith.constant 0 : i32
    return %c0_i32, %c0_i32_0 : i32, i32
  }
  func.func @transform_4(%arg0: i32, %arg1: i32) -> (i32, i32) {
    %c0_i32 = arith.constant 0 : i32
    %c0_i32_0 = arith.constant 0 : i32
    %c0_i32_1 = arith.constant 0 : i32
    return %c0_i32, %c0_i32_0 : i32, i32
  }
  func.func @transform_5(%arg0: i32, %arg1: i32) -> (i32, i32) {
    %c0_i32 = arith.constant 0 : i32
    %c0_i32_0 = arith.constant 0 : i32
    %c0_i32_1 = arith.constant 0 : i32
    return %c0_i32, %c0_i32_0 : i32, i32
  }
  func.func @transform_6(%arg0: i32, %arg1: i32) -> (i32, i32) {
    %c0_i32 = arith.constant 0 : i32
    %c0_i32_0 = arith.constant 0 : i32
    %c0_i32_1 = arith.constant 0 : i32
    return %c0_i32, %c0_i32_0 : i32, i32
  }
  func.func @transform_7(%arg0: i32, %arg1: i32) -> (i32, i32) {
    %c0_i32 = arith.constant 0 : i32
    %c0_i32_0 = arith.constant 0 : i32
    %c0_i32_1 = arith.constant 0 : i32
    return %c0_i32, %c0_i32_0 : i32, i32
  }
  func.func @transform_8(%arg0: i32, %arg1: i32) -> (i32, i32) {
    %c0_i32 = arith.constant 0 : i32
    %c0_i32_0 = arith.constant 0 : i32
    %c0_i32_1 = arith.constant 0 : i32
    return %c0_i32, %c0_i32_0 : i32, i32
  }
  func.func @transform_9(%arg0: i32, %arg1: i32) -> (i32, i32, i32) {
    %c0_i32 = arith.constant 0 : i32
    %c0_i32_0 = arith.constant 0 : i32
    return %arg0, %arg1, %c0_i32 : i32, i32, i32
  }
}

</mosaic_0001>

<llo_original>
// kernel: tpu_custom_call.1
$region0: #{tpu_custom_call.1}
  #allocation0 [shape = 'u32[]', space=smem, size = 0x4, offset = 0x4, fixed_abs, tag = 'smem constant byte address 0x4 - core index']
  #allocation1 [shape = 'u32[144,128]{1,0:T(1,128)}', space=vmem, size = 0x12000, scoped, tag = 'internal scratch']
  #allocation2 [shape = 'f32[256,64]{1,0:T(8,128)}', space=vmem, size = 0x20000, scoped, tag = 'scratch operand']
  #allocation3 [shape = 'f32[256,64]{1,0:T(8,128)}', space=vmem, size = 0x20000, scoped, tag = 'scratch operand']
  %s0 = inlined_call_operand.vmem [shape: f32[2,256,64], index: 0, kind: input, shape index: {}]
  %s1 = inlined_call_operand.vmem [shape: f32[64,64], index: 1, kind: input, shape index: {}]
  %s2 = inlined_call_operand.vmem [shape: f32[64,64], index: 2, kind: input, shape index: {}]
  %s3 = inlined_call_operand.vmem [shape: f32[64,64], index: 3, kind: input, shape index: {}]
  %s4 = inlined_call_operand.vmem [shape: f32[1,64], index: 4, kind: input, shape index: {}]
  %s5 = inlined_call_operand.vmem [shape: f32[1,64], index: 5, kind: input, shape index: {}]
  %s6 = inlined_call_operand.vmem [shape: f32[1,64], index: 6, kind: input, shape index: {}]
  %s7 = inlined_call_operand.vmem [shape: f32[64,64], index: 7, kind: input, shape index: {}]
  %s8 = inlined_call_operand.vmem [shape: f32[1,64], index: 8, kind: input, shape index: {}]
  %s9 = inlined_call_operand.vmem [shape: f32[2,256,64], index: 9, kind: output, shape index: {}]
  %s10 = sld [smem:[#allocation0]]
  $region73: #{tpu_custom_call.1} parent=0
    _
  %s12 = ssub.s32 1, %s10
  %s13 = scalar_select 0, %s12, %s10
  loop: start=0, step=1, limit=6
  $region2: #{tpu_custom_call.1} parent=0 // loop_pre_header
    _
  $region3: #{tpu_custom_call.1} parent=0 // loop_header
    %s15 = sphi 0, %s19
    %p16 = scmp.ge.s32.totalorder %s15, 6
    %s22 = sphi 0, %s34
    %s23 = sphi 0, %s30
    %s24 = sphi 0, %s22
    %s25 = sphi 0, %s23
    %s26 = sphi 0, %s24
    %s27 = sphi 0, %s25
    %s37 = sphi 0, %s39
    %s40 = sphi 0, %s37
    %s41 = sphi 0, %s40
    %s57 = sphi 0, %s41
    %s61 = sphi 0, %s61
    %s63 = sphi 0, %s61
    %s64 = sphi 0, %s63
    %s78 = sphi 0, %s64
    %s82 = sphi 0, %s82
    %s84 = sphi 0, %s82
    %s85 = sphi 0, %s84
    %s99 = sphi 0, %s85
    %s103 = sphi 0, %s103
    %s105 = sphi 0, %s103
    %s106 = sphi 0, %s105
    %s120 = sphi 0, %s106
    %s124 = sphi 0, %s124
    %s126 = sphi 0, %s124
    %s127 = sphi 0, %s126
    %s141 = sphi 0, %s127
    %s145 = sphi 0, %s145
    %s147 = sphi 0, %s145
    %s148 = sphi 0, %s147
    %s162 = sphi 0, %s148
    %s166 = sphi 0, %s166
    %s168 = sphi 0, %s166
    %s169 = sphi 0, %s168
    %s183 = sphi 0, %s169
    %s187 = sphi 0, %s187
    %s189 = sphi 0, %s187
    %s190 = sphi 0, %s189
    %s204 = sphi 0, %s190
    %s208 = sphi 0, %s208
    %s210 = sphi 0, %s208
    %s211 = sphi 0, %s210
    %s225 = sphi 0, %s211
    %s233 = sphi 0, %s235
    %s236 = sphi 0, %s233
    %s237 = sphi 0, %s236
    %s253 = sphi 0, %s237
  $region4: #{tpu_custom_call.1} parent=0 // loop_header_branch
    %18 = sbr.rel (%p16) target = $region8
  $region5: #{tpu_custom_call.1} parent=0 // loop_body
    %s20 = ssub.s32 %s15, 1
    %s21 = ssub.s32 %s15, 2
    %s28 = sadd.s32 1, %s23
    %p29 = scmp.ge.s32.totalorder %s28, 2
    %s30 = scalar_select %p29, 0, %s28
    %s31 = sadd.s32 1, %s22
    %s32 = scalar_select %p29, %s31, %s22
    %p33 = scmp.ge.s32.totalorder %s32, 2
    %s34 = scalar_select %p33, 0, %s32
    %s35 = ssub.s32 %s22, %s34
    %p36 = scmp.eq.s32.totalorder %s35, 0
    %s38 = sadd.s32 %s37, 1
    %s39 = scalar_select %p36, %s37, %s38
    %p42 = pneg %p36
    %p43 = scmp.eq.s32.totalorder %s15, 3
    %p44 = por %p42, %p43
    %p45 = scmp.ne.s32.totalorder %s37, %s40
    %p46 = scmp.eq.s32.totalorder %s15, 0
    %p47 = por %p45, %p46
    %p48 = scmp.ne.s32.totalorder %s37, %s40
    %p49 = scmp.eq.s32.totalorder %s20, 3
    %p50 = por %p48, %p49
    %p51 = scmp.ne.s32.totalorder %s40, %s41
    %p52 = scmp.eq.s32.totalorder %s20, 0
    %p53 = por %p51, %p52
    %p54 = scmp.ne.s32.totalorder %s40, %s41
    %p55 = scmp.eq.s32.totalorder %s21, 3
    %p56 = por %p54, %p55
    %p58 = scmp.ne.s32.totalorder %s41, %s57
    %p59 = scmp.eq.s32.totalorder %s21, 0
    %p60 = por %p58, %p59
    %s62 = sadd.s32 %s61, 1
    %p65 = scmp.eq.s32.totalorder %s15, 3
    %p66 = scmp.ne.s32.totalorder %s61, %s63
    %p67 = scmp.eq.s32.totalorder %s15, 0
    %p68 = por %p66, %p67
    %p69 = scmp.ne.s32.totalorder %s61, %s63
    %p70 = scmp.eq.s32.totalorder %s20, 3
    %p71 = por %p69, %p70
    %p72 = scmp.ne.s32.totalorder %s63, %s64
    %p73 = scmp.eq.s32.totalorder %s20, 0
    %p74 = por %p72, %p73
    %p75 = scmp.ne.s32.totalorder %s63, %s64
    %p76 = scmp.eq.s32.totalorder %s21, 3
    %p77 = por %p75, %p76
    %p79 = scmp.ne.s32.totalorder %s64, %s78
    %p80 = scmp.eq.s32.totalorder %s21, 0
    %p81 = por %p79, %p80
    %s83 = sadd.s32 %s82, 1
    %p86 = scmp.eq.s32.totalorder %s15, 3
    %p87 = scmp.ne.s32.totalorder %s82, %s84
    %p88 = scmp.eq.s32.totalorder %s15, 0
    %p89 = por %p87, %p88
    %p90 = scmp.ne.s32.totalorder %s82, %s84
    %p91 = scmp.eq.s32.totalorder %s20, 3
    %p92 = por %p90, %p91
    %p93 = scmp.ne.s32.totalorder %s84, %s85
    %p94 = scmp.eq.s32.totalorder %s20, 0
    %p95 = por %p93, %p94
    %p96 = scmp.ne.s32.totalorder %s84, %s85
    %p97 = scmp.eq.s32.totalorder %s21, 3
    %p98 = por %p96, %p97
    %p100 = scmp.ne.s32.totalorder %s85, %s99
    %p101 = scmp.eq.s32.totalorder %s21, 0
    %p102 = por %p100, %p101
    %s104 = sadd.s32 %s103, 1
    %p107 = scmp.eq.s32.totalorder %s15, 3
    %p108 = scmp.ne.s32.totalorder %s103, %s105
    %p109 = scmp.eq.s32.totalorder %s15, 0
    %p110 = por %p108, %p109
    %p111 = scmp.ne.s32.totalorder %s103, %s105
    %p112 = scmp.eq.s32.totalorder %s20, 3
    %p113 = por %p111, %p112
    %p114 = scmp.ne.s32.totalorder %s105, %s106
    %p115 = scmp.eq.s32.totalorder %s20, 0
    %p116 = por %p114, %p115
    %p117 = scmp.ne.s32.totalorder %s105, %s106
    %p118 = scmp.eq.s32.totalorder %s21, 3
    %p119 = por %p117, %p118
    %p121 = scmp.ne.s32.totalorder %s106, %s120
    %p122 = scmp.eq.s32.totalorder %s21, 0
    %p123 = por %p121, %p122
    %s125 = sadd.s32 %s124, 1
    %p128 = scmp.eq.s32.totalorder %s15, 3
    %p129 = scmp.ne.s32.totalorder %s124, %s126
    %p130 = scmp.eq.s32.totalorder %s15, 0
    %p131 = por %p129, %p130
    %p132 = scmp.ne.s32.totalorder %s124, %s126
    %p133 = scmp.eq.s32.totalorder %s20, 3
    %p134 = por %p132, %p133
    %p135 = scmp.ne.s32.totalorder %s126, %s127
    %p136 = scmp.eq.s32.totalorder %s20, 0
    %p137 = por %p135, %p136
    %p138 = scmp.ne.s32.totalorder %s126, %s127
    %p139 = scmp.eq.s32.totalorder %s21, 3
    %p140 = por %p138, %p139
    %p142 = scmp.ne.s32.totalorder %s127, %s141
    %p143 = scmp.eq.s32.totalorder %s21, 0
    %p144 = por %p142, %p143
    %s146 = sadd.s32 %s145, 1
    %p149 = scmp.eq.s32.totalorder %s15, 3
    %p150 = scmp.ne.s32.totalorder %s145, %s147
    %p151 = scmp.eq.s32.totalorder %s15, 0
    %p152 = por %p150, %p151
    %p153 = scmp.ne.s32.totalorder %s145, %s147
    %p154 = scmp.eq.s32.totalorder %s20, 3
    %p155 = por %p153, %p154
    %p156 = scmp.ne.s32.totalorder %s147, %s148
    %p157 = scmp.eq.s32.totalorder %s20, 0
    %p158 = por %p156, %p157
    %p159 = scmp.ne.s32.totalorder %s147, %s148
    %p160 = scmp.eq.s32.totalorder %s21, 3
    %p161 = por %p159, %p160
    %p163 = scmp.ne.s32.totalorder %s148, %s162
    %p164 = scmp.eq.s32.totalorder %s21, 0
    %p165 = por %p163, %p164
    %s167 = sadd.s32 %s166, 1
    %p170 = scmp.eq.s32.totalorder %s15, 3
    %p171 = scmp.ne.s32.totalorder %s166, %s168
    %p172 = scmp.eq.s32.totalorder %s15, 0
    %p173 = por %p171, %p172
    %p174 = scmp.ne.s32.totalorder %s166, %s168
    %p175 = scmp.eq.s32.totalorder %s20, 3
    %p176 = por %p174, %p175
    %p177 = scmp.ne.s32.totalorder %s168, %s169
    %p178 = scmp.eq.s32.totalorder %s20, 0
    %p179 = por %p177, %p178
    %p180 = scmp.ne.s32.totalorder %s168, %s169
    %p181 = scmp.eq.s32.totalorder %s21, 3
    %p182 = por %p180, %p181
    %p184 = scmp.ne.s32.totalorder %s169, %s183
    %p185 = scmp.eq.s32.totalorder %s21, 0
    %p186 = por %p184, %p185
    %s188 = sadd.s32 %s187, 1
    %p191 = scmp.eq.s32.totalorder %s15, 3
    %p192 = scmp.ne.s32.totalorder %s187, %s189
    %p193 = scmp.eq.s32.totalorder %s15, 0
    %p194 = por %p192, %p193
    %p195 = scmp.ne.s32.totalorder %s187, %s189
    %p196 = scmp.eq.s32.totalorder %s20, 3
    %p197 = por %p195, %p196
    %p198 = scmp.ne.s32.totalorder %s189, %s190
    %p199 = scmp.eq.s32.totalorder %s20, 0
    %p200 = por %p198, %p199
    %p201 = scmp.ne.s32.totalorder %s189, %s190
    %p202 = scmp.eq.s32.totalorder %s21, 3
    %p203 = por %p201, %p202
    %p205 = scmp.ne.s32.totalorder %s190, %s204
    %p206 = scmp.eq.s32.totalorder %s21, 0
    %p207 = por %p205, %p206
    %s209 = sadd.s32 %s208, 1
    %p212 = scmp.eq.s32.totalorder %s15, 3
    %p213 = scmp.ne.s32.totalorder %s208, %s210
    %p214 = scmp.eq.s32.totalorder %s15, 0
    %p215 = por %p213, %p214
    %p216 = scmp.ne.s32.totalorder %s208, %s210
    %p217 = scmp.eq.s32.totalorder %s20, 3
    %p218 = por %p216, %p217
    %p219 = scmp.ne.s32.totalorder %s210, %s211
    %p220 = scmp.eq.s32.totalorder %s20, 0
    %p221 = por %p219, %p220
    %p222 = scmp.ne.s32.totalorder %s210, %s211
    %p223 = scmp.eq.s32.totalorder %s21, 3
    %p224 = por %p222, %p223
    %p226 = scmp.ne.s32.totalorder %s211, %s225
    %p227 = scmp.eq.s32.totalorder %s21, 0
    %p228 = por %p226, %p227
    %s229 = ssub.s32 %s22, %s34
    %s230 = ssub.s32 %s23, %s30
    %s231 = sor.u32 %s229, %s230
    %p232 = scmp.eq.s32.totalorder %s231, 0
    %s234 = sadd.s32 %s233, 1
    %s235 = scalar_select %p232, %s233, %s234
    %p238 = pneg %p232
    %p239 = scmp.eq.s32.totalorder %s15, 3
    %p240 = por %p238, %p239
    %p241 = scmp.ne.s32.totalorder %s233, %s236
    %p242 = scmp.eq.s32.totalorder %s15, 0
    %p243 = por %p241, %p242
    %p244 = scmp.ne.s32.totalorder %s233, %s236
    %p245 = scmp.eq.s32.totalorder %s20, 3
    %p246 = por %p244, %p245
    %p247 = scmp.ne.s32.totalorder %s236, %s237
    %p248 = scmp.eq.s32.totalorder %s20, 0
    %p249 = por %p247, %p248
    %p250 = scmp.ne.s32.totalorder %s236, %s237
    %p251 = scmp.eq.s32.totalorder %s21, 3
    %p252 = por %p250, %p251
    %p254 = scmp.ne.s32.totalorder %s237, %s253
    %p255 = scmp.eq.s32.totalorder %s21, 0
    %p256 = por %p254, %p255
    %p257 = scmp.le.s32.totalorder 1, %s15
    %p258 = scmp.lt.s32.totalorder %s15, 5
    %p259 = pnand %p257, %p258
    %p260 = pneg %p259
    // Predicated region
    $region9: #{tpu_custom_call.1} parent=5 // pred_check
      _
    $region10: #{tpu_custom_call.1} parent=5 // pred_check_branch
      %262 = sbr.rel (%p259) target = $region12
    $region11: #{tpu_custom_call.1} parent=5 // pred_region
      %s263 = ssub.s32 %s15, 1
      // Predicated region
      $region13: #{tpu_custom_call.1} parent=11 // pred_check
        %p264 = pneg %p74
      $region14: #{tpu_custom_call.1} parent=11 // pred_check_branch
        %266 = sbr.rel (%p264) target = $region16
      $region15: #{tpu_custom_call.1} parent=11 // pred_region
        _
      $region16: #{tpu_custom_call.1} parent=11 // pred_fallthru
        _
      // Predicated region
      $region17: #{tpu_custom_call.1} parent=11 // pred_check
        %p267 = pneg %p95
      $region18: #{tpu_custom_call.1} parent=11 // pred_check_branch
        %269 = sbr.rel (%p267) target = $region20
      $region19: #{tpu_custom_call.1} parent=11 // pred_region
        _
      $region20: #{tpu_custom_call.1} parent=11 // pred_fallthru
        _
      // Predicated region
      $region21: #{tpu_custom_call.1} parent=11 // pred_check
        %p270 = pneg %p116
      $region22: #{tpu_custom_call.1} parent=11 // pred_check_branch
        %272 = sbr.rel (%p270) target = $region24
      $region23: #{tpu_custom_call.1} parent=11 // pred_region
        _
      $region24: #{tpu_custom_call.1} parent=11 // pred_fallthru
        _
      // Predicated region
      $region25: #{tpu_custom_call.1} parent=11 // pred_check
        %p273 = pneg %p137
      $region26: #{tpu_custom_call.1} parent=11 // pred_check_branch
        %275 = sbr.rel (%p273) target = $region28
      $region27: #{tpu_custom_call.1} parent=11 // pred_region
        _
      $region28: #{tpu_custom_call.1} parent=11 // pred_fallthru
        _
      // Predicated region
      $region29: #{tpu_custom_call.1} parent=11 // pred_check
        %p276 = pneg %p158
      $region30: #{tpu_custom_call.1} parent=11 // pred_check_branch
        %278 = sbr.rel (%p276) target = $region32
      $region31: #{tpu_custom_call.1} parent=11 // pred_region
        _
      $region32: #{tpu_custom_call.1} parent=11 // pred_fallthru
        _
      // Predicated region
      $region33: #{tpu_custom_call.1} parent=11 // pred_check
        %p279 = pneg %p179
      $region34: #{tpu_custom_call.1} parent=11 // pred_check_branch
        %281 = sbr.rel (%p279) target = $region36
      $region35: #{tpu_custom_call.1} parent=11 // pred_region
        _
      $region36: #{tpu_custom_call.1} parent=11 // pred_fallthru
        _
      // Predicated region
      $region37: #{tpu_custom_call.1} parent=11 // pred_check
        %p282 = pneg %p200
      $region38: #{tpu_custom_call.1} parent=11 // pred_check_branch
        %284 = sbr.rel (%p282) target = $region40
      $region39: #{tpu_custom_call.1} parent=11 // pred_region
        _
      $region40: #{tpu_custom_call.1} parent=11 // pred_fallthru
        _
      // Predicated region
      $region41: #{tpu_custom_call.1} parent=11 // pred_check
        %p285 = pneg %p221
      $region42: #{tpu_custom_call.1} parent=11 // pred_check_branch
        %287 = sbr.rel (%p285) target = $region44
      $region43: #{tpu_custom_call.1} parent=11 // pred_region
        _
      $region44: #{tpu_custom_call.1} parent=11 // pred_fallthru
        _
    $region12: #{tpu_custom_call.1} parent=5 // pred_fallthru
      _
    %p288 = scmp.lt.s32.totalorder %s15, 4
    // Predicated region
    $region45: #{tpu_custom_call.1} parent=5 // pred_check
      %p289 = pneg %p288
    $region46: #{tpu_custom_call.1} parent=5 // pred_check_branch
      %291 = sbr.rel (%p289) target = $region48
    $region47: #{tpu_custom_call.1} parent=5 // pred_region
      // Predicated region
      $region49: #{tpu_custom_call.1} parent=47 // pred_check
        %p292 = pneg %p47
      $region50: #{tpu_custom_call.1} parent=47 // pred_check_branch
        %294 = sbr.rel (%p292) target = $region52
      $region51: #{tpu_custom_call.1} parent=47 // pred_region
        %p295 = scmp.lt.s32.totalorder %s22, 1
        %s296 = scalar_select %p295, %s22, 1
        %s297 = smul.addr %s296, 32
        %s298 = smul.addr %s297, 8
        %s299 = scalar_lea.vmem %s0, %s298
      $region52: #{tpu_custom_call.1} parent=47 // pred_fallthru
        _
    $region48: #{tpu_custom_call.1} parent=5 // pred_fallthru
      _
    %p300 = scmp.le.s32.totalorder 1, %s15
    %p301 = scmp.lt.s32.totalorder %s15, 5
    %p302 = pnand %p300, %p301
    %p303 = pneg %p302
    // Predicated region
    $region53: #{tpu_custom_call.1} parent=5 // pred_check
      _
    $region54: #{tpu_custom_call.1} parent=5 // pred_check_branch
      %305 = sbr.rel (%p302) target = $region56
    $region55: #{tpu_custom_call.1} parent=5 // pred_region
      %s306 = ssub.s32 %s15, 1
      %p307 = scmp.lt.s32.totalorder %s24, 1
      %s308 = scalar_select %p307, %s24, 1
      %s309 = smul.addr %s308, 32
      %s310 = smul.addr %s309, 8
      %s311 = scalar_lea.vmem %s0, %s310
      %p312 = pneg %p53
      %p313 = pneg %p50
      %p314 = pneg %p74
      %p315 = pneg %p71
      %p316 = pneg %p95
      %p317 = pneg %p92
      %p318 = pneg %p116
      %p319 = pneg %p113
      %p320 = pneg %p137
      %p321 = pneg %p134
      %p322 = pneg %p158
      %p323 = pneg %p155
      %p324 = pneg %p179
      %p325 = pneg %p176
      %p326 = pneg %p200
      %p327 = pneg %p197
      %p328 = pneg %p221
      %p329 = pneg %p218
      %p330 = pneg %p249
      %p331 = pneg %p246
      %s332 = smul.u32 16, %s25
      %p333 = scmp.lt.s32.totalorder %s24, 1
      %s334 = scalar_select %p333, %s24, 1
      %p335 = scmp.lt.s32.totalorder %s332, 31
      %s336 = scalar_select %p335, %s332, 31
      %s337 = smul.addr %s334, 32
      %s338 = sadd.s32 %s336, %s337
      %s339 = smul.addr %s338, 8
      %s340 = scalar_lea.vmem %s9, %s339
      %p341 = scmp.lt.s32.totalorder %s24, 1
      %s342 = scalar_select %p341, %s24, 1
      %s343 = smul.addr %s342, 32
      %s344 = smul.addr %s343, 8
      %s345 = scalar_lea.vmem %s0, %s344
      %s346 = smul.u32 16, %s25
      %p347 = scmp.lt.s32.totalorder %s24, 1
      %s348 = scalar_select %p347, %s24, 1
      %p349 = scmp.lt.s32.totalorder %s346, 31
      %s350 = scalar_select %p349, %s346, 31
      %s351 = smul.addr %s348, 32
      %s352 = sadd.s32 %s350, %s351
      %s353 = smul.addr %s352, 8
      %s354 = scalar_lea.vmem %s9, %s353
      %s355 = smul.u32 16, %s25
      %p356 = scmp.eq.s32.totalorder %s25, 0
      // Predicated region
      $region57: #{tpu_custom_call.1} parent=55 // pred_check
        %p357 = pneg %p356
      $region58: #{tpu_custom_call.1} parent=55 // pred_check_branch
        %359 = sbr.rel (%p357) target = $region60
      $region59: #{tpu_custom_call.1} parent=55 // pred_region
        %v360 = vld [vmem:[%s345] sm:$0xff]
        %v361 = vld [vmem:[%s345 + $0x8] sm:$0xff]
        %v362 = vld [vmem:[%s345 + $0x10] sm:$0xff]
        %v363 = vld [vmem:[%s345 + $0x18] sm:$0xff]
        %v364 = vld [vmem:[%s345 + $0x20] sm:$0xff]
        %v365 = vld [vmem:[%s345 + $0x28] sm:$0xff]
        %v366 = vld [vmem:[%s345 + $0x30] sm:$0xff]
        %v367 = vld [vmem:[%s345 + $0x38] sm:$0xff]
        %v368 = vld [vmem:[%s345 + $0x40] sm:$0xff]
        %v369 = vld [vmem:[%s345 + $0x48] sm:$0xff]
        %v370 = vld [vmem:[%s345 + $0x50] sm:$0xff]
        %v371 = vld [vmem:[%s345 + $0x58] sm:$0xff]
        %v372 = vld [vmem:[%s345 + $0x60] sm:$0xff]
        %v373 = vld [vmem:[%s345 + $0x68] sm:$0xff]
        %v374 = vld [vmem:[%s345 + $0x70] sm:$0xff]
        %v375 = vld [vmem:[%s345 + $0x78] sm:$0xff]
        %v376 = vld [vmem:[%s345 + $0x80] sm:$0xff]
        %v377 = vld [vmem:[%s345 + $0x88] sm:$0xff]
        %v378 = vld [vmem:[%s345 + $0x90] sm:$0xff]
        %v379 = vld [vmem:[%s345 + $0x98] sm:$0xff]
        %v380 = vld [vmem:[%s345 + $0xa0] sm:$0xff]
        %v381 = vld [vmem:[%s345 + $0xa8] sm:$0xff]
        %v382 = vld [vmem:[%s345 + $0xb0] sm:$0xff]
        %v383 = vld [vmem:[%s345 + $0xb8] sm:$0xff]
        %v384 = vld [vmem:[%s345 + $0xc0] sm:$0xff]
        %v385 = vld [vmem:[%s345 + $0xc8] sm:$0xff]
        %v386 = vld [vmem:[%s345 + $0xd0] sm:$0xff]
        %v387 = vld [vmem:[%s345 + $0xd8] sm:$0xff]
        %v388 = vld [vmem:[%s345 + $0xe0] sm:$0xff]
        %v389 = vld [vmem:[%s345 + $0xe8] sm:$0xff]
        %v390 = vld [vmem:[%s345 + $0xf0] sm:$0xff]
        %v391 = vld [vmem:[%s345 + $0xf8] sm:$0xff]
        %v392 = vld [vmem:[%s2] sm:$0xff]
        %v393 = vld [vmem:[%s2 + $0x8] sm:$0xff]
        %v394 = vld [vmem:[%s2 + $0x10] sm:$0xff]
        %v395 = vld [vmem:[%s2 + $0x18] sm:$0xff]
        %v396 = vld [vmem:[%s2 + $0x20] sm:$0xff]
        %v397 = vld [vmem:[%s2 + $0x28] sm:$0xff]
        %v398 = vld [vmem:[%s2 + $0x30] sm:$0xff]
        %v399 = vld [vmem:[%s2 + $0x38] sm:$0xff]
        %v400 = vld [vmem:[%s5] sm:$0x1]
        %v402 = vlaneseq
        %v403 = vshrl.u32 %v402, 7
        %v404 = vsub.s32 0, %v403
        %v405 = vrot.slane %v400, %v404
        %vm407 = vcmask 523264
        %v409 = vsel %vm407, %v360, 0
        %v412 = vsel %vm407, %v361, 0
        %v415 = vsel %vm407, %v362, 0
        %v418 = vsel %vm407, %v363, 0
        %v421 = vsel %vm407, %v364, 0
        %v424 = vsel %vm407, %v365, 0
        %v427 = vsel %vm407, %v366, 0
        %v430 = vsel %vm407, %v367, 0
        %v433 = vsel %vm407, %v368, 0
        %v436 = vsel %vm407, %v369, 0
        %v439 = vsel %vm407, %v370, 0
        %v442 = vsel %vm407, %v371, 0
        %v445 = vsel %vm407, %v372, 0
        %v448 = vsel %vm407, %v373, 0
        %v451 = vsel %vm407, %v374, 0
        %v454 = vsel %vm407, %v375, 0
        %v457 = vsel %vm407, %v376, 0
        %v460 = vsel %vm407, %v377, 0
        %v463 = vsel %vm407, %v378, 0
        %v466 = vsel %vm407, %v379, 0
        %v469 = vsel %vm407, %v380, 0
        %v472 = vsel %vm407, %v381, 0
        %v475 = vsel %vm407, %v382, 0
        %v478 = vsel %vm407, %v383, 0
        %v481 = vsel %vm407, %v384, 0
        %v484 = vsel %vm407, %v385, 0
        %v487 = vsel %vm407, %v386, 0
        %v490 = vsel %vm407, %v387, 0
        %v493 = vsel %vm407, %v388, 0
        %v496 = vsel %vm407, %v389, 0
        %v499 = vsel %vm407, %v390, 0
        %v502 = vsel %vm407, %v391, 0
        %504 = vmatprep.subr.mxu0 0.0
        %505 = vmatpush1.msra.mxu0 %v392
        %506 = vmatprep.subr.mxu0 0.0
        %507 = vmatpush1.msra.mxu0 %v393
        %508 = vmatprep.subr.mxu0 0.0
        %509 = vmatpush1.msra.mxu0 %v394
        %510 = vmatprep.subr.mxu0 0.0
        %511 = vmatpush1.msra.mxu0 %v395
        %512 = vmatprep.subr.mxu0 0.0
        %513 = vmatpush1.msra.mxu0 %v396
        %514 = vmatprep.subr.mxu0 0.0
        %515 = vmatpush1.msra.mxu0 %v397
        %516 = vmatprep.subr.mxu0 0.0
        %517 = vmatpush1.msra.mxu0 %v398
        %518 = vmatprep.subr.mxu0 0.0
        %519 = vmatpush1.msra.mxu0 %v399
        %520 = vmatprep.subr.mxu0 0.0
        %521 = vmatpush1.msra.mxu0 0.0
        %522 = vmatprep.subr.mxu0 0.0
        %523 = vmatpush1.msra.mxu0 0.0
        %524 = vmatprep.subr.mxu0 0.0
        %525 = vmatpush1.msra.mxu0 0.0
        %526 = vmatprep.subr.mxu0 0.0
        %527 = vmatpush1.msra.mxu0 0.0
        %528 = vmatprep.subr.mxu0 0.0
        %529 = vmatpush1.msra.mxu0 0.0
        %530 = vmatprep.subr.mxu0 0.0
        %531 = vmatpush1.msra.mxu0 0.0
        %532 = vmatprep.subr.mxu0 0.0
        %533 = vmatpush1.msra.mxu0 0.0
        %534 = vmatprep.subr.mxu0 0.0
        %535 = vmatpush1.msra.mxu0 0.0
        %536 = vmatprep.subr.mxu0 0.0
        %537 = vmatpush1.msra.mxu0 0.0
        %538 = vmatprep.subr.mxu0 0.0
        %539 = vmatpush1.msra.mxu0 0.0
        %540 = vmatprep.subr.mxu0 0.0
        %541 = vmatpush1.msra.mxu0 0.0
        %542 = vmatprep.subr.mxu0 0.0
        %543 = vmatpush1.msra.mxu0 0.0
        %544 = vmatprep.subr.mxu0 0.0
        %545 = vmatpush1.msra.mxu0 0.0
        %546 = vmatprep.subr.mxu0 0.0
        %547 = vmatpush1.msra.mxu0 0.0
        %548 = vmatprep.subr.mxu0 0.0
        %549 = vmatpush1.msra.mxu0 0.0
        %550 = vmatprep.subr.mxu0 0.0
        %551 = vmatpush1.msra.mxu0 0.0
        %552 = vmatprep.subr.mxu0 0.0
        %553 = vmatpush1.msra.mxu0 0.0
        %554 = vmatprep.subr.mxu0 0.0
        %555 = vmatpush1.msra.mxu0 0.0
        %556 = vmatprep.subr.mxu0 0.0
        %557 = vmatpush1.msra.mxu0 0.0
        %558 = vmatprep.subr.mxu0 0.0
        %559 = vmatpush1.msra.mxu0 0.0
        %560 = vmatprep.subr.mxu0 0.0
        %561 = vmatpush1.msra.mxu0 0.0
        %562 = vmatprep.subr.mxu0 0.0
        %563 = vmatpush1.msra.mxu0 0.0
        %564 = vmatprep.subr.mxu0 0.0
        %565 = vmatpush1.msra.mxu0 0.0
        %566 = vmatprep.subr.mxu0 0.0
        %567 = vmatpush1.msra.mxu0 0.0
        %568 = vmatprep.mubr.f32.mxu0 0.0
        %569 = vmatmul.mubr.f32.gmra.mrb[0].mxu0 %v409
        %v570 = vpop.f32.mrb[0].mxu0
        %v571 = vadd.f32 %v405, %v570
        %v572 = vpop.f32.mrb[0].mxu0
        %573 = vmatprep.mubr.f32.mxu0 0.0
        %574 = vmatmul.mubr.f32.gmra.mrb[0].mxu0 %v412
        %v575 = vpop.f32.mrb[0].mxu0
        %v576 = vadd.f32 %v405, %v575
        %v577 = vpop.f32.mrb[0].mxu0
        %578 = vmatprep.mubr.f32.mxu0 0.0
        %579 = vmatmul.mubr.f32.gmra.mrb[0].mxu0 %v415
        %v580 = vpop.f32.mrb[0].mxu0
        %v581 = vadd.f32 %v405, %v580
        %v582 = vpop.f32.mrb[0].mxu0
        %583 = vmatprep.mubr.f32.mxu0 0.0
        %584 = vmatmul.mubr.f32.gmra.mrb[0].mxu0 %v418
        %v585 = vpop.f32.mrb[0].mxu0
        %v586 = vadd.f32 %v405, %v585
        %v587 = vpop.f32.mrb[0].mxu0
        %588 = vmatprep.mubr.f32.mxu0 0.0
        %589 = vmatmul.mubr.f32.gmra.mrb[0].mxu0 %v421
        %v590 = vpop.f32.mrb[0].mxu0
        %v591 = vadd.f32 %v405, %v590
        %v592 = vpop.f32.mrb[0].mxu0
        %593 = vmatprep.mubr.f32.mxu0 0.0
        %594 = vmatmul.mubr.f32.gmra.mrb[0].mxu0 %v424
        %v595 = vpop.f32.mrb[0].mxu0
        %v596 = vadd.f32 %v405, %v595
        %v597 = vpop.f32.mrb[0].mxu0
        %598 = vmatprep.mubr.f32.mxu0 0.0
        %599 = vmatmul.mubr.f32.gmra.mrb[0].mxu0 %v427
        %v600 = vpop.f32.mrb[0].mxu0
        %v601 = vadd.f32 %v405, %v600
        %v602 = vpop.f32.mrb[0].mxu0
        %603 = vmatprep.mubr.f32.mxu0 0.0
        %604 = vmatmul.mubr.f32.gmra.mrb[0].mxu0 %v430
        %v605 = vpop.f32.mrb[0].mxu0
        %v606 = vadd.f32 %v405, %v605
        %v607 = vpop.f32.mrb[0].mxu0
        %608 = vmatprep.mubr.f32.mxu0 0.0
        %609 = vmatmul.mubr.f32.gmra.mrb[0].mxu0 %v433
        %v610 = vpop.f32.mrb[0].mxu0
        %v611 = vadd.f32 %v405, %v610
        %v612 = vpop.f32.mrb[0].mxu0
        %613 = vmatprep.mubr.f32.mxu0 0.0
        %614 = vmatmul.mubr.f32.gmra.mrb[0].mxu0 %v436
        %v615 = vpop.f32.mrb[0].mxu0
        %v616 = vadd.f32 %v405, %v615
        %v617 = vpop.f32.mrb[0].mxu0
        %618 = vmatprep.mubr.f32.mxu0 0.0
        %619 = vmatmul.mubr.f32.gmra.mrb[0].mxu0 %v439
        %v620 = vpop.f32.mrb[0].mxu0
        %v621 = vadd.f32 %v405, %v620
        %v622 = vpop.f32.mrb[0].mxu0
        %623 = vmatprep.mubr.f32.mxu0 0.0
        %624 = vmatmul.mubr.f32.gmra.mrb[0].mxu0 %v442
        %v625 = vpop.f32.mrb[0].mxu0
        %v626 = vadd.f32 %v405, %v625
        %v627 = vpop.f32.mrb[0].mxu0
        %628 = vmatprep.mubr.f32.mxu0 0.0
        %629 = vmatmul.mubr.f32.gmra.mrb[0].mxu0 %v445
        %v630 = vpop.f32.mrb[0].mxu0
        %v631 = vadd.f32 %v405, %v630
        %v632 = vpop.f32.mrb[0].mxu0
        %633 = vmatprep.mubr.f32.mxu0 0.0
        %634 = vmatmul.mubr.f32.gmra.mrb[0].mxu0 %v448
        %v635 = vpop.f32.mrb[0].mxu0
        %v636 = vadd.f32 %v405, %v635
        %v637 = vpop.f32.mrb[0].mxu0
        %638 = vmatprep.mubr.f32.mxu0 0.0
        %639 = vmatmul.mubr.f32.gmra.mrb[0].mxu0 %v451
        %v640 = vpop.f32.mrb[0].mxu0
        %v641 = vadd.f32 %v405, %v640
        %v642 = vpop.f32.mrb[0].mxu0
        %643 = vmatprep.mubr.f32.mxu0 0.0
        %644 = vmatmul.mubr.f32.gmra.mrb[0].mxu0 %v454
        %v645 = vpop.f32.mrb[0].mxu0
        %v646 = vadd.f32 %v405, %v645
        %v647 = vpop.f32.mrb[0].mxu0
        %648 = vmatprep.mubr.f32.mxu0 0.0
        %649 = vmatmul.mubr.f32.gmra.mrb[0].mxu0 %v457
        %v650 = vpop.f32.mrb[0].mxu0
        %v651 = vadd.f32 %v405, %v650
        %v652 = vpop.f32.mrb[0].mxu0
        %653 = vmatprep.mubr.f32.mxu0 0.0
        %654 = vmatmul.mubr.f32.gmra.mrb[0].mxu0 %v460
        %v655 = vpop.f32.mrb[0].mxu0
        %v656 = vadd.f32 %v405, %v655
        %v657 = vpop.f32.mrb[0].mxu0
        %658 = vmatprep.mubr.f32.mxu0 0.0
        %659 = vmatmul.mubr.f32.gmra.mrb[0].mxu0 %v463
        %v660 = vpop.f32.mrb[0].mxu0
        %v661 = vadd.f32 %v405, %v660
        %v662 = vpop.f32.mrb[0].mxu0
        %663 = vmatprep.mubr.f32.mxu0 0.0
        %664 = vmatmul.mubr.f32.gmra.mrb[0].mxu0 %v466
        %v665 = vpop.f32.mrb[0].mxu0
        %v666 = vadd.f32 %v405, %v665
        %v667 = vpop.f32.mrb[0].mxu0
        %668 = vmatprep.mubr.f32.mxu0 0.0
        %669 = vmatmul.mubr.f32.gmra.mrb[0].mxu0 %v469
        %v670 = vpop.f32.mrb[0].mxu0
        %v671 = vadd.f32 %v405, %v670
        %v672 = vpop.f32.mrb[0].mxu0
        %673 = vmatprep.mubr.f32.mxu0 0.0
        %674 = vmatmul.mubr.f32.gmra.mrb[0].mxu0 %v472
        %v675 = vpop.f32.mrb[0].mxu0
        %v676 = vadd.f32 %v405, %v675
        %v677 = vpop.f32.mrb[0].mxu0
        %678 = vmatprep.mubr.f32.mxu0 0.0
        %679 = vmatmul.mubr.f32.gmra.mrb[0].mxu0 %v475
        %v680 = vpop.f32.mrb[0].mxu0
        %v681 = vadd.f32 %v405, %v680
        %v682 = vpop.f32.mrb[0].mxu0
        %683 = vmatprep.mubr.f32.mxu0 0.0
        %684 = vmatmul.mubr.f32.gmra.mrb[0].mxu0 %v478
        %v685 = vpop.f32.mrb[0].mxu0
        %v686 = vadd.f32 %v405, %v685
        %v687 = vpop.f32.mrb[0].mxu0
        %688 = vmatprep.mubr.f32.mxu0 0.0
        %689 = vmatmul.mubr.f32.gmra.mrb[0].mxu0 %v481
        %v690 = vpop.f32.mrb[0].mxu0
        %v691 = vadd.f32 %v405, %v690
        %v692 = vpop.f32.mrb[0].mxu0
        %693 = vmatprep.mubr.f32.mxu0 0.0
        %694 = vmatmul.mubr.f32.gmra.mrb[0].mxu0 %v484
        %v695 = vpop.f32.mrb[0].mxu0
        %v696 = vadd.f32 %v405, %v695
        %v697 = vpop.f32.mrb[0].mxu0
        %698 = vmatprep.mubr.f32.mxu0 0.0
        %699 = vmatmul.mubr.f32.gmra.mrb[0].mxu0 %v487
        %v700 = vpop.f32.mrb[0].mxu0
        %v701 = vadd.f32 %v405, %v700
        %v702 = vpop.f32.mrb[0].mxu0
        %703 = vmatprep.mubr.f32.mxu0 0.0
        %704 = vmatmul.mubr.f32.gmra.mrb[0].mxu0 %v490
        %v705 = vpop.f32.mrb[0].mxu0
        %v706 = vadd.f32 %v405, %v705
        %v707 = vpop.f32.mrb[0].mxu0
        %708 = vmatprep.mubr.f32.mxu0 0.0
        %709 = vmatmul.mubr.f32.gmra.mrb[0].mxu0 %v493
        %v710 = vpop.f32.mrb[0].mxu0
        %v711 = vadd.f32 %v405, %v710
        %v712 = vpop.f32.mrb[0].mxu0
        %713 = vmatprep.mubr.f32.mxu0 0.0
        %714 = vmatmul.mubr.f32.gmra.mrb[0].mxu0 %v496
        %v715 = vpop.f32.mrb[0].mxu0
        %v716 = vadd.f32 %v405, %v715
        %v717 = vpop.f32.mrb[0].mxu0
        %718 = vmatprep.mubr.f32.mxu0 0.0
        %719 = vmatmul.mubr.f32.gmra.mrb[0].mxu0 %v499
        %v720 = vpop.f32.mrb[0].mxu0
        %v721 = vadd.f32 %v405, %v720
        %v722 = vpop.f32.mrb[0].mxu0
        %723 = vmatprep.mubr.f32.mxu0 0.0
        %724 = vmatmul.mubr.f32.gmra.mrb[0].mxu0 %v502
        %v725 = vpop.f32.mrb[0].mxu0
        %v726 = vadd.f32 %v405, %v725
        %v727 = vpop.f32.mrb[0].mxu0
        %728 = vdwg.mxu0
        %v729 = vld [vmem:[%s3] sm:$0xff]
        %v730 = vld [vmem:[%s3 + $0x8] sm:$0xff]
        %v731 = vld [vmem:[%s3 + $0x10] sm:$0xff]
        %v732 = vld [vmem:[%s3 + $0x18] sm:$0xff]
        %v733 = vld [vmem:[%s3 + $0x20] sm:$0xff]
        %v734 = vld [vmem:[%s3 + $0x28] sm:$0xff]
        %v735 = vld [vmem:[%s3 + $0x30] sm:$0xff]
        %v736 = vld [vmem:[%s3 + $0x38] sm:$0xff]
        %v737 = vld [vmem:[%s6] sm:$0x1]
        %v739 = vlaneseq
        %v740 = vshrl.u32 %v739, 7
        %v741 = vsub.s32 0, %v740
        %v742 = vrot.slane %v737, %v741
        %744 = vmatprep.subr.mxu0 0.0
        %745 = vmatpush1.msra.mxu0 %v729
        %746 = vmatprep.subr.mxu0 0.0
        %747 = vmatpush1.msra.mxu0 %v730
        %748 = vmatprep.subr.mxu0 0.0
        %749 = vmatpush1.msra.mxu0 %v731
        %750 = vmatprep.subr.mxu0 0.0
        %751 = vmatpush1.msra.mxu0 %v732
        %752 = vmatprep.subr.mxu0 0.0
        %753 = vmatpush1.msra.mxu0 %v733
        %754 = vmatprep.subr.mxu0 0.0
        %755 = vmatpush1.msra.mxu0 %v734
        %756 = vmatprep.subr.mxu0 0.0
        %757 = vmatpush1.msra.mxu0 %v735
        %758 = vmatprep.subr.mxu0 0.0
        %759 = vmatpush1.msra.mxu0 %v736
        %760 = vmatprep.subr.mxu0 0.0
        %761 = vmatpush1.msra.mxu0 0.0
        %762 = vmatprep.subr.mxu0 0.0
        %763 = vmatpush1.msra.mxu0 0.0
        %764 = vmatprep.subr.mxu0 0.0
        %765 = vmatpush1.msra.mxu0 0.0
        %766 = vmatprep.subr.mxu0 0.0
        %767 = vmatpush1.msra.mxu0 0.0
        %768 = vmatprep.subr.mxu0 0.0
        %769 = vmatpush1.msra.mxu0 0.0
        %770 = vmatprep.subr.mxu0 0.0
        %771 = vmatpush1.msra.mxu0 0.0
        %772 = vmatprep.subr.mxu0 0.0
        %773 = vmatpush1.msra.mxu0 0.0
        %774 = vmatprep.subr.mxu0 0.0
        %775 = vmatpush1.msra.mxu0 0.0
        %776 = vmatprep.subr.mxu0 0.0
        %777 = vmatpush1.msra.mxu0 0.0
        %778 = vmatprep.subr.mxu0 0.0
        %779 = vmatpush1.msra.mxu0 0.0
        %780 = vmatprep.subr.mxu0 0.0
        %781 = vmatpush1.msra.mxu0 0.0
        %782 = vmatprep.subr.mxu0 0.0
        %783 = vmatpush1.msra.mxu0 0.0
        %784 = vmatprep.subr.mxu0 0.0
        %785 = vmatpush1.msra.mxu0 0.0
        %786 = vmatprep.subr.mxu0 0.0
        %787 = vmatpush1.msra.mxu0 0.0
        %788 = vmatprep.subr.mxu0 0.0
        %789 = vmatpush1.msra.mxu0 0.0
        %790 = vmatprep.subr.mxu0 0.0
        %791 = vmatpush1.msra.mxu0 0.0
        %792 = vmatprep.subr.mxu0 0.0
        %793 = vmatpush1.msra.mxu0 0.0
        %794 = vmatprep.subr.mxu0 0.0
        %795 = vmatpush1.msra.mxu0 0.0
        %796 = vmatprep.subr.mxu0 0.0
        %797 = vmatpush1.msra.mxu0 0.0
        %798 = vmatprep.subr.mxu0 0.0
        %799 = vmatpush1.msra.mxu0 0.0
        %800 = vmatprep.subr.mxu0 0.0
        %801 = vmatpush1.msra.mxu0 0.0
        %802 = vmatprep.subr.mxu0 0.0
        %803 = vmatpush1.msra.mxu0 0.0
        %804 = vmatprep.subr.mxu0 0.0
        %805 = vmatpush1.msra.mxu0 0.0
        %806 = vmatprep.subr.mxu0 0.0
        %807 = vmatpush1.msra.mxu0 0.0
        %808 = vmatprep.mubr.f32.mxu0 0.0
        %809 = vmatmul.mubr.f32.gmra.mrb[0].mxu0 %v409
        %v810 = vpop.f32.mrb[0].mxu0
        %v811 = vadd.f32 %v742, %v810
        %v812 = vpop.f32.mrb[0].mxu0
        %813 = vmatprep.mubr.f32.mxu0 0.0
        %814 = vmatmul.mubr.f32.gmra.mrb[0].mxu0 %v412
        %v815 = vpop.f32.mrb[0].mxu0
        %v816 = vadd.f32 %v742, %v815
        %v817 = vpop.f32.mrb[0].mxu0
        %818 = vmatprep.mubr.f32.mxu0 0.0
        %819 = vmatmul.mubr.f32.gmra.mrb[0].mxu0 %v415
        %v820 = vpop.f32.mrb[0].mxu0
        %v821 = vadd.f32 %v742, %v820
        %v822 = vpop.f32.mrb[0].mxu0
        %823 = vmatprep.mubr.f32.mxu0 0.0
        %824 = vmatmul.mubr.f32.gmra.mrb[0].mxu0 %v418
        %v825 = vpop.f32.mrb[0].mxu0
        %v826 = vadd.f32 %v742, %v825
        %v827 = vpop.f32.mrb[0].mxu0
        %828 = vmatprep.mubr.f32.mxu0 0.0
        %829 = vmatmul.mubr.f32.gmra.mrb[0].mxu0 %v421
        %v830 = vpop.f32.mrb[0].mxu0
        %v831 = vadd.f32 %v742, %v830
        %v832 = vpop.f32.mrb[0].mxu0
        %833 = vmatprep.mubr.f32.mxu0 0.0
        %834 = vmatmul.mubr.f32.gmra.mrb[0].mxu0 %v424
        %v835 = vpop.f32.mrb[0].mxu0
        %v836 = vadd.f32 %v742, %v835
        %v837 = vpop.f32.mrb[0].mxu0
        %838 = vmatprep.mubr.f32.mxu0 0.0
        %839 = vmatmul.mubr.f32.gmra.mrb[0].mxu0 %v427
        %v840 = vpop.f32.mrb[0].mxu0
        %v841 = vadd.f32 %v742, %v840
        %v842 = vpop.f32.mrb[0].mxu0
        %843 = vmatprep.mubr.f32.mxu0 0.0
        %844 = vmatmul.mubr.f32.gmra.mrb[0].mxu0 %v430
        %v845 = vpop.f32.mrb[0].mxu0
        %v846 = vadd.f32 %v742, %v845
        %v847 = vpop.f32.mrb[0].mxu0
        %848 = vmatprep.mubr.f32.mxu0 0.0
        %849 = vmatmul.mubr.f32.gmra.mrb[0].mxu0 %v433
        %v850 = vpop.f32.mrb[0].mxu0
        %v851 = vadd.f32 %v742, %v850
        %v852 = vpop.f32.mrb[0].mxu0
        %853 = vmatprep.mubr.f32.mxu0 0.0
        %854 = vmatmul.mubr.f32.gmra.mrb[0].mxu0 %v436
        %v855 = vpop.f32.mrb[0].mxu0
        %v856 = vadd.f32 %v742, %v855
        %v857 = vpop.f32.mrb[0].mxu0
        %858 = vmatprep.mubr.f32.mxu0 0.0
        %859 = vmatmul.mubr.f32.gmra.mrb[0].mxu0 %v439
        %v860 = vpop.f32.mrb[0].mxu0
        %v861 = vadd.f32 %v742, %v860
        %v862 = vpop.f32.mrb[0].mxu0
        %863 = vmatprep.mubr.f32.mxu0 0.0
        %864 = vmatmul.mubr.f32.gmra.mrb[0].mxu0 %v442
        %v865 = vpop.f32.mrb[0].mxu0
        %v866 = vadd.f32 %v742, %v865
        %v867 = vpop.f32.mrb[0].mxu0
        %868 = vmatprep.mubr.f32.mxu0 0.0
        %869 = vmatmul.mubr.f32.gmra.mrb[0].mxu0 %v445
        %v870 = vpop.f32.mrb[0].mxu0
        %v871 = vadd.f32 %v742, %v870
        %v872 = vpop.f32.mrb[0].mxu0
        %873 = vmatprep.mubr.f32.mxu0 0.0
        %874 = vmatmul.mubr.f32.gmra.mrb[0].mxu0 %v448
        %v875 = vpop.f32.mrb[0].mxu0
        %v876 = vadd.f32 %v742, %v875
        %v877 = vpop.f32.mrb[0].mxu0
        %878 = vmatprep.mubr.f32.mxu0 0.0
        %879 = vmatmul.mubr.f32.gmra.mrb[0].mxu0 %v451
        %v880 = vpop.f32.mrb[0].mxu0
        %v881 = vadd.f32 %v742, %v880
        %v882 = vpop.f32.mrb[0].mxu0
        %883 = vmatprep.mubr.f32.mxu0 0.0
        %884 = vmatmul.mubr.f32.gmra.mrb[0].mxu0 %v454
        %v885 = vpop.f32.mrb[0].mxu0
        %v886 = vadd.f32 %v742, %v885
        %v887 = vpop.f32.mrb[0].mxu0
        %888 = vmatprep.mubr.f32.mxu0 0.0
        %889 = vmatmul.mubr.f32.gmra.mrb[0].mxu0 %v457
        %v890 = vpop.f32.mrb[0].mxu0
        %v891 = vadd.f32 %v742, %v890
        %v892 = vpop.f32.mrb[0].mxu0
        %893 = vmatprep.mubr.f32.mxu0 0.0
        %894 = vmatmul.mubr.f32.gmra.mrb[0].mxu0 %v460
        %v895 = vpop.f32.mrb[0].mxu0
        %v896 = vadd.f32 %v742, %v895
        %v897 = vpop.f32.mrb[0].mxu0
        %898 = vmatprep.mubr.f32.mxu0 0.0
        %899 = vmatmul.mubr.f32.gmra.mrb[0].mxu0 %v463
        %v900 = vpop.f32.mrb[0].mxu0
        %v901 = vadd.f32 %v742, %v900
        %v902 = vpop.f32.mrb[0].mxu0
        %903 = vmatprep.mubr.f32.mxu0 0.0
        %904 = vmatmul.mubr.f32.gmra.mrb[0].mxu0 %v466
        %v905 = vpop.f32.mrb[0].mxu0
        %v906 = vadd.f32 %v742, %v905
        %v907 = vpop.f32.mrb[0].mxu0
        %908 = vmatprep.mubr.f32.mxu0 0.0
        %909 = vmatmul.mubr.f32.gmra.mrb[0].mxu0 %v469
        %v910 = vpop.f32.mrb[0].mxu0
        %v911 = vadd.f32 %v742, %v910
        %v912 = vpop.f32.mrb[0].mxu0
        %913 = vmatprep.mubr.f32.mxu0 0.0
        %914 = vmatmul.mubr.f32.gmra.mrb[0].mxu0 %v472
        %v915 = vpop.f32.mrb[0].mxu0
        %v916 = vadd.f32 %v742, %v915
        %v917 = vpop.f32.mrb[0].mxu0
        %918 = vmatprep.mubr.f32.mxu0 0.0
        %919 = vmatmul.mubr.f32.gmra.mrb[0].mxu0 %v475
        %v920 = vpop.f32.mrb[0].mxu0
        %v921 = vadd.f32 %v742, %v920
        %v922 = vpop.f32.mrb[0].mxu0
        %923 = vmatprep.mubr.f32.mxu0 0.0
        %924 = vmatmul.mubr.f32.gmra.mrb[0].mxu0 %v478
        %v925 = vpop.f32.mrb[0].mxu0
        %v926 = vadd.f32 %v742, %v925
        %v927 = vpop.f32.mrb[0].mxu0
        %928 = vmatprep.mubr.f32.mxu0 0.0
        %929 = vmatmul.mubr.f32.gmra.mrb[0].mxu0 %v481
        %v930 = vpop.f32.mrb[0].mxu0
        %v931 = vadd.f32 %v742, %v930
        %v932 = vpop.f32.mrb[0].mxu0
        %933 = vmatprep.mubr.f32.mxu0 0.0
        %934 = vmatmul.mubr.f32.gmra.mrb[0].mxu0 %v484
        %v935 = vpop.f32.mrb[0].mxu0
        %v936 = vadd.f32 %v742, %v935
        %v937 = vpop.f32.mrb[0].mxu0
        %938 = vmatprep.mubr.f32.mxu0 0.0
        %939 = vmatmul.mubr.f32.gmra.mrb[0].mxu0 %v487
        %v940 = vpop.f32.mrb[0].mxu0
        %v941 = vadd.f32 %v742, %v940
        %v942 = vpop.f32.mrb[0].mxu0
        %943 = vmatprep.mubr.f32.mxu0 0.0
        %944 = vmatmul.mubr.f32.gmra.mrb[0].mxu0 %v490
        %v945 = vpop.f32.mrb[0].mxu0
        %v946 = vadd.f32 %v742, %v945
        %v947 = vpop.f32.mrb[0].mxu0
        %948 = vmatprep.mubr.f32.mxu0 0.0
        %949 = vmatmul.mubr.f32.gmra.mrb[0].mxu0 %v493
        %v950 = vpop.f32.mrb[0].mxu0
        %v951 = vadd.f32 %v742, %v950
        %v952 = vpop.f32.mrb[0].mxu0
        %953 = vmatprep.mubr.f32.mxu0 0.0
        %954 = vmatmul.mubr.f32.gmra.mrb[0].mxu0 %v496
        %v955 = vpop.f32.mrb[0].mxu0
        %v956 = vadd.f32 %v742, %v955
        %v957 = vpop.f32.mrb[0].mxu0
        %958 = vmatprep.mubr.f32.mxu0 0.0
        %959 = vmatmul.mubr.f32.gmra.mrb[0].mxu0 %v499
        %v960 = vpop.f32.mrb[0].mxu0
        %v961 = vadd.f32 %v742, %v960
        %v962 = vpop.f32.mrb[0].mxu0
        %963 = vmatprep.mubr.f32.mxu0 0.0
        %964 = vmatmul.mubr.f32.gmra.mrb[0].mxu0 %v502
        %v965 = vpop.f32.mrb[0].mxu0
        %v966 = vadd.f32 %v742, %v965
        %v967 = vpop.f32.mrb[0].mxu0
        %968 = vdwg.mxu0
        %969 = vst.msk [vmem:[#allocation2] sm:$0xff] %vm407, %v571
        %970 = vst.msk [vmem:[#allocation2 + $0x8] sm:$0xff] %vm407, %v576
        %971 = vst.msk [vmem:[#allocation2 + $0x10] sm:$0xff] %vm407, %v581
        %972 = vst.msk [vmem:[#allocation2 + $0x18] sm:$0xff] %vm407, %v586
        %973 = vst.msk [vmem:[#allocation2 + $0x20] sm:$0xff] %vm407, %v591
        %974 = vst.msk [vmem:[#allocation2 + $0x28] sm:$0xff] %vm407, %v596
        %975 = vst.msk [vmem:[#allocation2 + $0x30] sm:$0xff] %vm407, %v601
        %976 = vst.msk [vmem:[#allocation2 + $0x38] sm:$0xff] %vm407, %v606
        %977 = vst.msk [vmem:[#allocation2 + $0x40] sm:$0xff] %vm407, %v611
        %978 = vst.msk [vmem:[#allocation2 + $0x48] sm:$0xff] %vm407, %v616
        %979 = vst.msk [vmem:[#allocation2 + $0x50] sm:$0xff] %vm407, %v621
        %980 = vst.msk [vmem:[#allocation2 + $0x58] sm:$0xff] %vm407, %v626
        %981 = vst.msk [vmem:[#allocation2 + $0x60] sm:$0xff] %vm407, %v631
        %982 = vst.msk [vmem:[#allocation2 + $0x68] sm:$0xff] %vm407, %v636
        %983 = vst.msk [vmem:[#allocation2 + $0x70] sm:$0xff] %vm407, %v641
        %984 = vst.msk [vmem:[#allocation2 + $0x78] sm:$0xff] %vm407, %v646
        %985 = vst.msk [vmem:[#allocation2 + $0x80] sm:$0xff] %vm407, %v651
        %986 = vst.msk [vmem:[#allocation2 + $0x88] sm:$0xff] %vm407, %v656
        %987 = vst.msk [vmem:[#allocation2 + $0x90] sm:$0xff] %vm407, %v661
        %988 = vst.msk [vmem:[#allocation2 + $0x98] sm:$0xff] %vm407, %v666
        %989 = vst.msk [vmem:[#allocation2 + $0xa0] sm:$0xff] %vm407, %v671
        %990 = vst.msk [vmem:[#allocation2 + $0xa8] sm:$0xff] %vm407, %v676
        %991 = vst.msk [vmem:[#allocation2 + $0xb0] sm:$0xff] %vm407, %v681
        %992 = vst.msk [vmem:[#allocation2 + $0xb8] sm:$0xff] %vm407, %v686
        %993 = vst.msk [vmem:[#allocation2 + $0xc0] sm:$0xff] %vm407, %v691
        %994 = vst.msk [vmem:[#allocation2 + $0xc8] sm:$0xff] %vm407, %v696
        %995 = vst.msk [vmem:[#allocation2 + $0xd0] sm:$0xff] %vm407, %v701
        %996 = vst.msk [vmem:[#allocation2 + $0xd8] sm:$0xff] %vm407, %v706
        %997 = vst.msk [vmem:[#allocation2 + $0xe0] sm:$0xff] %vm407, %v711
        %998 = vst.msk [vmem:[#allocation2 + $0xe8] sm:$0xff] %vm407, %v716
        %999 = vst.msk [vmem:[#allocation2 + $0xf0] sm:$0xff] %vm407, %v721
        %1000 = vst.msk [vmem:[#allocation2 + $0xf8] sm:$0xff] %vm407, %v726
        %1001 = vst.msk [vmem:[#allocation3] sm:$0xff] %vm407, %v811
        %1002 = vst.msk [vmem:[#allocation3 + $0x8] sm:$0xff] %vm407, %v816
        %1003 = vst.msk [vmem:[#allocation3 + $0x10] sm:$0xff] %vm407, %v821
        %1004 = vst.msk [vmem:[#allocation3 + $0x18] sm:$0xff] %vm407, %v826
        %1005 = vst.msk [vmem:[#allocation3 + $0x20] sm:$0xff] %vm407, %v831
        %1006 = vst.msk [vmem:[#allocation3 + $0x28] sm:$0xff] %vm407, %v836
        %1007 = vst.msk [vmem:[#allocation3 + $0x30] sm:$0xff] %vm407, %v841
        %1008 = vst.msk [vmem:[#allocation3 + $0x38] sm:$0xff] %vm407, %v846
        %1009 = vst.msk [vmem:[#allocation3 + $0x40] sm:$0xff] %vm407, %v851
        %1010 = vst.msk [vmem:[#allocation3 + $0x48] sm:$0xff] %vm407, %v856
        %1011 = vst.msk [vmem:[#allocation3 + $0x50] sm:$0xff] %vm407, %v861
        %1012 = vst.msk [vmem:[#allocation3 + $0x58] sm:$0xff] %vm407, %v866
        %1013 = vst.msk [vmem:[#allocation3 + $0x60] sm:$0xff] %vm407, %v871
        %1014 = vst.msk [vmem:[#allocation3 + $0x68] sm:$0xff] %vm407, %v876
        %1015 = vst.msk [vmem:[#allocation3 + $0x70] sm:$0xff] %vm407, %v881
        %1016 = vst.msk [vmem:[#allocation3 + $0x78] sm:$0xff] %vm407, %v886
        %1017 = vst.msk [vmem:[#allocation3 + $0x80] sm:$0xff] %vm407, %v891
        %1018 = vst.msk [vmem:[#allocation3 + $0x88] sm:$0xff] %vm407, %v896
        %1019 = vst.msk [vmem:[#allocation3 + $0x90] sm:$0xff] %vm407, %v901
        %1020 = vst.msk [vmem:[#allocation3 + $0x98] sm:$0xff] %vm407, %v906
        %1021 = vst.msk [vmem:[#allocation3 + $0xa0] sm:$0xff] %vm407, %v911
        %1022 = vst.msk [vmem:[#allocation3 + $0xa8] sm:$0xff] %vm407, %v916
        %1023 = vst.msk [vmem:[#allocation3 + $0xb0] sm:$0xff] %vm407, %v921
        %1024 = vst.msk [vmem:[#allocation3 + $0xb8] sm:$0xff] %vm407, %v926
        %1025 = vst.msk [vmem:[#allocation3 + $0xc0] sm:$0xff] %vm407, %v931
        %1026 = vst.msk [vmem:[#allocation3 + $0xc8] sm:$0xff] %vm407, %v936
        %1027 = vst.msk [vmem:[#allocation3 + $0xd0] sm:$0xff] %vm407, %v941
        %1028 = vst.msk [vmem:[#allocation3 + $0xd8] sm:$0xff] %vm407, %v946
        %1029 = vst.msk [vmem:[#allocation3 + $0xe0] sm:$0xff] %vm407, %v951
        %1030 = vst.msk [vmem:[#allocation3 + $0xe8] sm:$0xff] %vm407, %v956
        %1031 = vst.msk [vmem:[#allocation3 + $0xf0] sm:$0xff] %vm407, %v961
        %1032 = vst.msk [vmem:[#allocation3 + $0xf8] sm:$0xff] %vm407, %v966
      $region60: #{tpu_custom_call.1} parent=55 // pred_fallthru
        _
      %s1033 = smul.u32 %s25, 128
      %s1034 = scalar_lea.vmem %s345, %s1033
      %v1035 = vld [vmem:[%s1034] sm:$0xff]
      %v1036 = vld [vmem:[%s1034 + $0x8] sm:$0xff]
      %v1037 = vld [vmem:[%s1034 + $0x10] sm:$0xff]
      %v1038 = vld [vmem:[%s1034 + $0x18] sm:$0xff]
      %v1039 = vld [vmem:[%s1034 + $0x20] sm:$0xff]
      %v1040 = vld [vmem:[%s1034 + $0x28] sm:$0xff]
      %v1041 = vld [vmem:[%s1034 + $0x30] sm:$0xff]
      %v1042 = vld [vmem:[%s1034 + $0x38] sm:$0xff]
      %v1043 = vld [vmem:[%s1034 + $0x40] sm:$0xff]
      %v1044 = vld [vmem:[%s1034 + $0x48] sm:$0xff]
      %v1045 = vld [vmem:[%s1034 + $0x50] sm:$0xff]
      %v1046 = vld [vmem:[%s1034 + $0x58] sm:$0xff]
      %v1047 = vld [vmem:[%s1034 + $0x60] sm:$0xff]
      %v1048 = vld [vmem:[%s1034 + $0x68] sm:$0xff]
      %v1049 = vld [vmem:[%s1034 + $0x70] sm:$0xff]
      %v1050 = vld [vmem:[%s1034 + $0x78] sm:$0xff]
      %v1051 = vld [vmem:[%s1] sm:$0xff]
      %v1052 = vld [vmem:[%s1 + $0x8] sm:$0xff]
      %v1053 = vld [vmem:[%s1 + $0x10] sm:$0xff]
      %v1054 = vld [vmem:[%s1 + $0x18] sm:$0xff]
      %v1055 = vld [vmem:[%s1 + $0x20] sm:$0xff]
      %v1056 = vld [vmem:[%s1 + $0x28] sm:$0xff]
      %v1057 = vld [vmem:[%s1 + $0x30] sm:$0xff]
      %v1058 = vld [vmem:[%s1 + $0x38] sm:$0xff]
      %v1059 = vld [vmem:[%s4] sm:$0x1]
      %v1061 = vlaneseq
      %v1062 = vshrl.u32 %v1061, 7
      %v1063 = vsub.s32 0, %v1062
      %v1064 = vrot.slane %v1059, %v1063
      %vm1066 = vcmask 523264
      %v1068 = vsel %vm1066, %v1035, 0
      %v1071 = vsel %vm1066, %v1036, 0
      %v1074 = vsel %vm1066, %v1037, 0
      %v1077 = vsel %vm1066, %v1038, 0
      %v1080 = vsel %vm1066, %v1039, 0
      %v1083 = vsel %vm1066, %v1040, 0
      %v1086 = vsel %vm1066, %v1041, 0
      %v1089 = vsel %vm1066, %v1042, 0
      %v1092 = vsel %vm1066, %v1043, 0
      %v1095 = vsel %vm1066, %v1044, 0
      %v1098 = vsel %vm1066, %v1045, 0
      %v1101 = vsel %vm1066, %v1046, 0
      %v1104 = vsel %vm1066, %v1047, 0
      %v1107 = vsel %vm1066, %v1048, 0
      %v1110 = vsel %vm1066, %v1049, 0
      %v1113 = vsel %vm1066, %v1050, 0
      %1115 = vmatprep.subr.mxu0 0.0
      %1116 = vmatpush1.msra.mxu0 %v1051
      %1117 = vmatprep.subr.mxu0 0.0
      %1118 = vmatpush1.msra.mxu0 %v1052
      %1119 = vmatprep.subr.mxu0 0.0
      %1120 = vmatpush1.msra.mxu0 %v1053
      %1121 = vmatprep.subr.mxu0 0.0
      %1122 = vmatpush1.msra.mxu0 %v1054
      %1123 = vmatprep.subr.mxu0 0.0
      %1124 = vmatpush1.msra.mxu0 %v1055
      %1125 = vmatprep.subr.mxu0 0.0
      %1126 = vmatpush1.msra.mxu0 %v1056
      %1127 = vmatprep.subr.mxu0 0.0
      %1128 = vmatpush1.msra.mxu0 %v1057
      %1129 = vmatprep.subr.mxu0 0.0
      %1130 = vmatpush1.msra.mxu0 %v1058
      %1131 = vmatprep.subr.mxu0 0.0
      %1132 = vmatpush1.msra.mxu0 0.0
      %1133 = vmatprep.subr.mxu0 0.0
      %1134 = vmatpush1.msra.mxu0 0.0
      %1135 = vmatprep.subr.mxu0 0.0
      %1136 = vmatpush1.msra.mxu0 0.0
      %1137 = vmatprep.subr.mxu0 0.0
      %1138 = vmatpush1.msra.mxu0 0.0
      %1139 = vmatprep.subr.mxu0 0.0
      %1140 = vmatpush1.msra.mxu0 0.0
      %1141 = vmatprep.subr.mxu0 0.0
      %1142 = vmatpush1.msra.mxu0 0.0
      %1143 = vmatprep.subr.mxu0 0.0
      %1144 = vmatpush1.msra.mxu0 0.0
      %1145 = vmatprep.subr.mxu0 0.0
      %1146 = vmatpush1.msra.mxu0 0.0
      %1147 = vmatprep.subr.mxu0 0.0
      %1148 = vmatpush1.msra.mxu0 0.0
      %1149 = vmatprep.subr.mxu0 0.0
      %1150 = vmatpush1.msra.mxu0 0.0
      %1151 = vmatprep.subr.mxu0 0.0
      %1152 = vmatpush1.msra.mxu0 0.0
      %1153 = vmatprep.subr.mxu0 0.0
      %1154 = vmatpush1.msra.mxu0 0.0
      %1155 = vmatprep.subr.mxu0 0.0
      %1156 = vmatpush1.msra.mxu0 0.0
      %1157 = vmatprep.subr.mxu0 0.0
      %1158 = vmatpush1.msra.mxu0 0.0
      %1159 = vmatprep.subr.mxu0 0.0
      %1160 = vmatpush1.msra.mxu0 0.0
      %1161 = vmatprep.subr.mxu0 0.0
      %1162 = vmatpush1.msra.mxu0 0.0
      %1163 = vmatprep.subr.mxu0 0.0
      %1164 = vmatpush1.msra.mxu0 0.0
      %1165 = vmatprep.subr.mxu0 0.0
      %1166 = vmatpush1.msra.mxu0 0.0
      %1167 = vmatprep.subr.mxu0 0.0
      %1168 = vmatpush1.msra.mxu0 0.0
      %1169 = vmatprep.subr.mxu0 0.0
      %1170 = vmatpush1.msra.mxu0 0.0
      %1171 = vmatprep.subr.mxu0 0.0
      %1172 = vmatpush1.msra.mxu0 0.0
      %1173 = vmatprep.subr.mxu0 0.0
      %1174 = vmatpush1.msra.mxu0 0.0
      %1175 = vmatprep.subr.mxu0 0.0
      %1176 = vmatpush1.msra.mxu0 0.0
      %1177 = vmatprep.subr.mxu0 0.0
      %1178 = vmatpush1.msra.mxu0 0.0
      %1179 = vmatprep.mubr.f32.mxu0 0.0
      %1180 = vmatmul.mubr.f32.gmra.mrb[0].mxu0 %v1068
      %v1181 = vpop.f32.mrb[0].mxu0
      %v1182 = vadd.f32 %v1064, %v1181
      %v1183 = vpop.f32.mrb[0].mxu0
      %1184 = vmatprep.mubr.f32.mxu0 0.0
      %1185 = vmatmul.mubr.f32.gmra.mrb[0].mxu0 %v1071
      %v1186 = vpop.f32.mrb[0].mxu0
      %v1187 = vadd.f32 %v1064, %v1186
      %v1188 = vpop.f32.mrb[0].mxu0
      %1189 = vmatprep.mubr.f32.mxu0 0.0
      %1190 = vmatmul.mubr.f32.gmra.mrb[0].mxu0 %v1074
      %v1191 = vpop.f32.mrb[0].mxu0
      %v1192 = vadd.f32 %v1064, %v1191
      %v1193 = vpop.f32.mrb[0].mxu0
      %1194 = vmatprep.mubr.f32.mxu0 0.0
      %1195 = vmatmul.mubr.f32.gmra.mrb[0].mxu0 %v1077
      %v1196 = vpop.f32.mrb[0].mxu0
      %v1197 = vadd.f32 %v1064, %v1196
      %v1198 = vpop.f32.mrb[0].mxu0
      %1199 = vmatprep.mubr.f32.mxu0 0.0
      %1200 = vmatmul.mubr.f32.gmra.mrb[0].mxu0 %v1080
      %v1201 = vpop.f32.mrb[0].mxu0
      %v1202 = vadd.f32 %v1064, %v1201
      %v1203 = vpop.f32.mrb[0].mxu0
      %1204 = vmatprep.mubr.f32.mxu0 0.0
      %1205 = vmatmul.mubr.f32.gmra.mrb[0].mxu0 %v1083
      %v1206 = vpop.f32.mrb[0].mxu0
      %v1207 = vadd.f32 %v1064, %v1206
      %v1208 = vpop.f32.mrb[0].mxu0
      %1209 = vmatprep.mubr.f32.mxu0 0.0
      %1210 = vmatmul.mubr.f32.gmra.mrb[0].mxu0 %v1086
      %v1211 = vpop.f32.mrb[0].mxu0
      %v1212 = vadd.f32 %v1064, %v1211
      %v1213 = vpop.f32.mrb[0].mxu0
      %1214 = vmatprep.mubr.f32.mxu0 0.0
      %1215 = vmatmul.mubr.f32.gmra.mrb[0].mxu0 %v1089
      %v1216 = vpop.f32.mrb[0].mxu0
      %v1217 = vadd.f32 %v1064, %v1216
      %v1218 = vpop.f32.mrb[0].mxu0
      %1219 = vmatprep.mubr.f32.mxu0 0.0
      %1220 = vmatmul.mubr.f32.gmra.mrb[0].mxu0 %v1092
      %v1221 = vpop.f32.mrb[0].mxu0
      %v1222 = vadd.f32 %v1064, %v1221
      %v1223 = vpop.f32.mrb[0].mxu0
      %1224 = vmatprep.mubr.f32.mxu0 0.0
      %1225 = vmatmul.mubr.f32.gmra.mrb[0].mxu0 %v1095
      %v1226 = vpop.f32.mrb[0].mxu0
      %v1227 = vadd.f32 %v1064, %v1226
      %v1228 = vpop.f32.mrb[0].mxu0
      %1229 = vmatprep.mubr.f32.mxu0 0.0
      %1230 = vmatmul.mubr.f32.gmra.mrb[0].mxu0 %v1098
      %v1231 = vpop.f32.mrb[0].mxu0
      %v1232 = vadd.f32 %v1064, %v1231
      %v1233 = vpop.f32.mrb[0].mxu0
      %1234 = vmatprep.mubr.f32.mxu0 0.0
      %1235 = vmatmul.mubr.f32.gmra.mrb[0].mxu0 %v1101
      %v1236 = vpop.f32.mrb[0].mxu0
      %v1237 = vadd.f32 %v1064, %v1236
      %v1238 = vpop.f32.mrb[0].mxu0
      %1239 = vmatprep.mubr.f32.mxu0 0.0
      %1240 = vmatmul.mubr.f32.gmra.mrb[0].mxu0 %v1104
      %v1241 = vpop.f32.mrb[0].mxu0
      %v1242 = vadd.f32 %v1064, %v1241
      %v1243 = vpop.f32.mrb[0].mxu0
      %1244 = vmatprep.mubr.f32.mxu0 0.0
      %1245 = vmatmul.mubr.f32.gmra.mrb[0].mxu0 %v1107
      %v1246 = vpop.f32.mrb[0].mxu0
      %v1247 = vadd.f32 %v1064, %v1246
      %v1248 = vpop.f32.mrb[0].mxu0
      %1249 = vmatprep.mubr.f32.mxu0 0.0
      %1250 = vmatmul.mubr.f32.gmra.mrb[0].mxu0 %v1110
      %v1251 = vpop.f32.mrb[0].mxu0
      %v1252 = vadd.f32 %v1064, %v1251
      %v1253 = vpop.f32.mrb[0].mxu0
      %1254 = vmatprep.mubr.f32.mxu0 0.0
      %1255 = vmatmul.mubr.f32.gmra.mrb[0].mxu0 %v1113
      %v1256 = vpop.f32.mrb[0].mxu0
      %v1257 = vadd.f32 %v1064, %v1256
      %v1258 = vpop.f32.mrb[0].mxu0
      %1259 = vdwg.mxu0
      %v1260 = vld [vmem:[#allocation2] sm:$0xff]
      %v1261 = vld [vmem:[#allocation2 + $0x8] sm:$0xff]
      %v1262 = vld [vmem:[#allocation2 + $0x10] sm:$0xff]
      %v1263 = vld [vmem:[#allocation2 + $0x18] sm:$0xff]
      %v1264 = vld [vmem:[#allocation2 + $0x20] sm:$0xff]
      %v1265 = vld [vmem:[#allocation2 + $0x28] sm:$0xff]
      %v1266 = vld [vmem:[#allocation2 + $0x30] sm:$0xff]
      %v1267 = vld [vmem:[#allocation2 + $0x38] sm:$0xff]
      %v1268 = vld [vmem:[#allocation2 + $0x40] sm:$0xff]
      %v1269 = vld [vmem:[#allocation2 + $0x48] sm:$0xff]
      %v1270 = vld [vmem:[#allocation2 + $0x50] sm:$0xff]
      %v1271 = vld [vmem:[#allocation2 + $0x58] sm:$0xff]
      %v1272 = vld [vmem:[#allocation2 + $0x60] sm:$0xff]
      %v1273 = vld [vmem:[#allocation2 + $0x68] sm:$0xff]
      %v1274 = vld [vmem:[#allocation2 + $0x70] sm:$0xff]
      %v1275 = vld [vmem:[#allocation2 + $0x78] sm:$0xff]
      %v1276 = vld [vmem:[#allocation2 + $0x80] sm:$0xff]
      %v1277 = vld [vmem:[#allocation2 + $0x88] sm:$0xff]
      %v1278 = vld [vmem:[#allocation2 + $0x90] sm:$0xff]
      %v1279 = vld [vmem:[#allocation2 + $0x98] sm:$0xff]
      %v1280 = vld [vmem:[#allocation2 + $0xa0] sm:$0xff]
      %v1281 = vld [vmem:[#allocation2 + $0xa8] sm:$0xff]
      %v1282 = vld [vmem:[#allocation2 + $0xb0] sm:$0xff]
      %v1283 = vld [vmem:[#allocation2 + $0xb8] sm:$0xff]
      %v1284 = vld [vmem:[#allocation2 + $0xc0] sm:$0xff]
      %v1285 = vld [vmem:[#allocation2 + $0xc8] sm:$0xff]
      %v1286 = vld [vmem:[#allocation2 + $0xd0] sm:$0xff]
      %v1287 = vld [vmem:[#allocation2 + $0xd8] sm:$0xff]
      %v1288 = vld [vmem:[#allocation2 + $0xe0] sm:$0xff]
      %v1289 = vld [vmem:[#allocation2 + $0xe8] sm:$0xff]
      %v1290 = vld [vmem:[#allocation2 + $0xf0] sm:$0xff]
      %v1291 = vld [vmem:[#allocation2 + $0xf8] sm:$0xff]
      %v1293 = vsel %vm1066, %v1182, 0
      %v1296 = vsel %vm1066, %v1187, 0
      %v1299 = vsel %vm1066, %v1192, 0
      %v1302 = vsel %vm1066, %v1197, 0
      %v1305 = vsel %vm1066, %v1202, 0
      %v1308 = vsel %vm1066, %v1207, 0
      %v1311 = vsel %vm1066, %v1212, 0
      %v1314 = vsel %vm1066, %v1217, 0
      %v1317 = vsel %vm1066, %v1222, 0
      %v1320 = vsel %vm1066, %v1227, 0
      %v1323 = vsel %vm1066, %v1232, 0
      %v1326 = vsel %vm1066, %v1237, 0
      %v1329 = vsel %vm1066, %v1242, 0
      %v1332 = vsel %vm1066, %v1247, 0
      %v1335 = vsel %vm1066, %v1252, 0
      %v1338 = vsel %vm1066, %v1257, 0
      %v1341 = vsel %vm1066, %v1260, 0
      %v1344 = vsel %vm1066, %v1261, 0
      %v1347 = vsel %vm1066, %v1262, 0
      %v1350 = vsel %vm1066, %v1263, 0
      %v1353 = vsel %vm1066, %v1264, 0
      %v1356 = vsel %vm1066, %v1265, 0
      %v1359 = vsel %vm1066, %v1266, 0
      %v1362 = vsel %vm1066, %v1267, 0
      %v1365 = vsel %vm1066, %v1268, 0
      %v1368 = vsel %vm1066, %v1269, 0
      %v1371 = vsel %vm1066, %v1270, 0
      %v1374 = vsel %vm1066, %v1271, 0
      %v1377 = vsel %vm1066, %v1272, 0
      %v1380 = vsel %vm1066, %v1273, 0
      %v1383 = vsel %vm1066, %v1274, 0
      %v1386 = vsel %vm1066, %v1275, 0
      %v1389 = vsel %vm1066, %v1276, 0
      %v1392 = vsel %vm1066, %v1277, 0
      %v1395 = vsel %vm1066, %v1278, 0
      %v1398 = vsel %vm1066, %v1279, 0
      %v1401 = vsel %vm1066, %v1280, 0
      %v1404 = vsel %vm1066, %v1281, 0
      %v1407 = vsel %vm1066, %v1282, 0
      %v1410 = vsel %vm1066, %v1283, 0
      %v1413 = vsel %vm1066, %v1284, 0
      %v1416 = vsel %vm1066, %v1285, 0
      %v1419 = vsel %vm1066, %v1286, 0
      %v1422 = vsel %vm1066, %v1287, 0
      %v1425 = vsel %vm1066, %v1288, 0
      %v1428 = vsel %vm1066, %v1289, 0
      %v1431 = vsel %vm1066, %v1290, 0
      %v1434 = vsel %vm1066, %v1291, 0
      %1436 = vmatprep.subr.mxu0 0.0
      %1437 = vmatpush1.xpose.msra.mxu0 %v1341
      %1438 = vmatprep.subr.mxu0 0.0
      %1439 = vmatpush1.xpose.msra.mxu0 %v1344
      %1440 = vmatprep.subr.mxu0 0.0
      %1441 = vmatpush1.xpose.msra.mxu0 %v1347
      %1442 = vmatprep.subr.mxu0 0.0
      %1443 = vmatpush1.xpose.msra.mxu0 %v1350
      %1444 = vmatprep.subr.mxu0 0.0
      %1445 = vmatpush1.xpose.msra.mxu0 %v1353
      %1446 = vmatprep.subr.mxu0 0.0
      %1447 = vmatpush1.xpose.msra.mxu0 %v1356
      %1448 = vmatprep.subr.mxu0 0.0
      %1449 = vmatpush1.xpose.msra.mxu0 %v1359
      %1450 = vmatprep.subr.mxu0 0.0
      %1451 = vmatpush1.xpose.msra.mxu0 %v1362
      %1452 = vmatprep.subr.mxu0 0.0
      %1453 = vmatpush1.xpose.msra.mxu0 %v1365
      %1454 = vmatprep.subr.mxu0 0.0
      %1455 = vmatpush1.xpose.msra.mxu0 %v1368
      %1456 = vmatprep.subr.mxu0 0.0
      %1457 = vmatpush1.xpose.msra.mxu0 %v1371
      %1458 = vmatprep.subr.mxu0 0.0
      %1459 = vmatpush1.xpose.msra.mxu0 %v1374
      %1460 = vmatprep.subr.mxu0 0.0
      %1461 = vmatpush1.xpose.msra.mxu0 %v1377
      %1462 = vmatprep.subr.mxu0 0.0
      %1463 = vmatpush1.xpose.msra.mxu0 %v1380
      %1464 = vmatprep.subr.mxu0 0.0
      %1465 = vmatpush1.xpose.msra.mxu0 %v1383
      %1466 = vmatprep.subr.mxu0 0.0
      %1467 = vmatpush1.xpose.msra.mxu0 %v1386
      %1468 = vmatprep.subr.mxu0 0.0
      %1469 = vmatpush1.xpose.msra.mxu0 %v1389
      %1470 = vmatprep.subr.mxu0 0.0
      %1471 = vmatpush1.xpose.msra.mxu0 %v1392
      %1472 = vmatprep.subr.mxu0 0.0
      %1473 = vmatpush1.xpose.msra.mxu0 %v1395
      %1474 = vmatprep.subr.mxu0 0.0
      %1475 = vmatpush1.xpose.msra.mxu0 %v1398
      %1476 = vmatprep.subr.mxu0 0.0
      %1477 = vmatpush1.xpose.msra.mxu0 %v1401
      %1478 = vmatprep.subr.mxu0 0.0
      %1479 = vmatpush1.xpose.msra.mxu0 %v1404
      %1480 = vmatprep.subr.mxu0 0.0
      %1481 = vmatpush1.xpose.msra.mxu0 %v1407
      %1482 = vmatprep.subr.mxu0 0.0
      %1483 = vmatpush1.xpose.msra.mxu0 %v1410
      %1484 = vmatprep.subr.mxu0 0.0
      %1485 = vmatpush1.xpose.msra.mxu0 %v1413
      %1486 = vmatprep.subr.mxu0 0.0
      %1487 = vmatpush1.xpose.msra.mxu0 %v1416
      %1488 = vmatprep.subr.mxu0 0.0
      %1489 = vmatpush1.xpose.msra.mxu0 %v1419
      %1490 = vmatprep.subr.mxu0 0.0
      %1491 = vmatpush1.xpose.msra.mxu0 %v1422
      %1492 = vmatprep.subr.mxu0 0.0
      %1493 = vmatpush1.xpose.msra.mxu0 %v1425
      %1494 = vmatprep.subr.mxu0 0.0
      %1495 = vmatpush1.xpose.msra.mxu0 %v1428
      %1496 = vmatprep.subr.mxu0 0.0
      %1497 = vmatpush1.xpose.msra.mxu0 %v1431
      %1498 = vmatprep.subr.mxu0 0.0
      %1499 = vmatpush1.xpose.msra.mxu0 %v1434
      %1500 = vmatprep.mubr.f32.mxu0 0.0
      %1501 = vmatmul.mubr.f32.gmra.mrb[0].mxu0 %v1293
      %v1502 = vpop.f32.mrb[0].mxu0
      %v1503 = vadd.f32 0.0, %v1502
      %v1504 = vpop.f32.mrb[0].mxu0
      %v1505 = vadd.f32 0.0, %v1504
      %1506 = vmatprep.mubr.f32.mxu0 0.0
      %1507 = vmatmul.mubr.f32.gmra.mrb[0].mxu0 %v1296
      %v1508 = vpop.f32.mrb[0].mxu0
      %v1509 = vadd.f32 0.0, %v1508
      %v1510 = vpop.f32.mrb[0].mxu0
      %v1511 = vadd.f32 0.0, %v1510
      %1512 = vmatprep.mubr.f32.mxu0 0.0
      %1513 = vmatmul.mubr.f32.gmra.mrb[0].mxu0 %v1299
      %v1514 = vpop.f32.mrb[0].mxu0
      %v1515 = vadd.f32 0.0, %v1514
      %v1516 = vpop.f32.mrb[0].mxu0
      %v1517 = vadd.f32 0.0, %v1516
      %1518 = vmatprep.mubr.f32.mxu0 0.0
      %1519 = vmatmul.mubr.f32.gmra.mrb[0].mxu0 %v1302
      %v1520 = vpop.f32.mrb[0].mxu0
      %v1521 = vadd.f32 0.0, %v1520
      %v1522 = vpop.f32.mrb[0].mxu0
      %v1523 = vadd.f32 0.0, %v1522
      %1524 = vmatprep.mubr.f32.mxu0 0.0
      %1525 = vmatmul.mubr.f32.gmra.mrb[0].mxu0 %v1305
      %v1526 = vpop.f32.mrb[0].mxu0
      %v1527 = vadd.f32 0.0, %v1526
      %v1528 = vpop.f32.mrb[0].mxu0
      %v1529 = vadd.f32 0.0, %v1528
      %1530 = vmatprep.mubr.f32.mxu0 0.0
      %1531 = vmatmul.mubr.f32.gmra.mrb[0].mxu0 %v1308
      %v1532 = vpop.f32.mrb[0].mxu0
      %v1533 = vadd.f32 0.0, %v1532
      %v1534 = vpop.f32.mrb[0].mxu0
      %v1535 = vadd.f32 0.0, %v1534
      %1536 = vmatprep.mubr.f32.mxu0 0.0
      %1537 = vmatmul.mubr.f32.gmra.mrb[0].mxu0 %v1311
      %v1538 = vpop.f32.mrb[0].mxu0
      %v1539 = vadd.f32 0.0, %v1538
      %v1540 = vpop.f32.mrb[0].mxu0
      %v1541 = vadd.f32 0.0, %v1540
      %1542 = vmatprep.mubr.f32.mxu0 0.0
      %1543 = vmatmul.mubr.f32.gmra.mrb[0].mxu0 %v1314
      %v1544 = vpop.f32.mrb[0].mxu0
      %v1545 = vadd.f32 0.0, %v1544
      %v1546 = vpop.f32.mrb[0].mxu0
      %v1547 = vadd.f32 0.0, %v1546
      %1548 = vmatprep.mubr.f32.mxu0 0.0
      %1549 = vmatmul.mubr.f32.gmra.mrb[0].mxu0 %v1317
      %v1550 = vpop.f32.mrb[0].mxu0
      %v1551 = vadd.f32 0.0, %v1550
      %v1552 = vpop.f32.mrb[0].mxu0
      %v1553 = vadd.f32 0.0, %v1552
      %1554 = vmatprep.mubr.f32.mxu0 0.0
      %1555 = vmatmul.mubr.f32.gmra.mrb[0].mxu0 %v1320
      %v1556 = vpop.f32.mrb[0].mxu0
      %v1557 = vadd.f32 0.0, %v1556
      %v1558 = vpop.f32.mrb[0].mxu0
      %v1559 = vadd.f32 0.0, %v1558
      %1560 = vmatprep.mubr.f32.mxu0 0.0
      %1561 = vmatmul.mubr.f32.gmra.mrb[0].mxu0 %v1323
      %v1562 = vpop.f32.mrb[0].mxu0
      %v1563 = vadd.f32 0.0, %v1562
      %v1564 = vpop.f32.mrb[0].mxu0
      %v1565 = vadd.f32 0.0, %v1564
      %1566 = vmatprep.mubr.f32.mxu0 0.0
      %1567 = vmatmul.mubr.f32.gmra.mrb[0].mxu0 %v1326
      %v1568 = vpop.f32.mrb[0].mxu0
      %v1569 = vadd.f32 0.0, %v1568
      %v1570 = vpop.f32.mrb[0].mxu0
      %v1571 = vadd.f32 0.0, %v1570
      %1572 = vmatprep.mubr.f32.mxu0 0.0
      %1573 = vmatmul.mubr.f32.gmra.mrb[0].mxu0 %v1329
      %v1574 = vpop.f32.mrb[0].mxu0
      %v1575 = vadd.f32 0.0, %v1574
      %v1576 = vpop.f32.mrb[0].mxu0
      %v1577 = vadd.f32 0.0, %v1576
      %1578 = vmatprep.mubr.f32.mxu0 0.0
      %1579 = vmatmul.mubr.f32.gmra.mrb[0].mxu0 %v1332
      %v1580 = vpop.f32.mrb[0].mxu0
      %v1581 = vadd.f32 0.0, %v1580
      %v1582 = vpop.f32.mrb[0].mxu0
      %v1583 = vadd.f32 0.0, %v1582
      %1584 = vmatprep.mubr.f32.mxu0 0.0
      %1585 = vmatmul.mubr.f32.gmra.mrb[0].mxu0 %v1335
      %v1586 = vpop.f32.mrb[0].mxu0
      %v1587 = vadd.f32 0.0, %v1586
      %v1588 = vpop.f32.mrb[0].mxu0
      %v1589 = vadd.f32 0.0, %v1588
      %1590 = vmatprep.mubr.f32.mxu0 0.0
      %1591 = vmatmul.mubr.f32.gmra.mrb[0].mxu0 %v1338
      %v1592 = vpop.f32.mrb[0].mxu0
      %v1593 = vadd.f32 0.0, %v1592
      %v1594 = vpop.f32.mrb[0].mxu0
      %v1595 = vadd.f32 0.0, %v1594
      %1596 = vdwg.mxu0
      %v1597 = vmax.f32 %v1503, %v1505
      %1598 = vmax.xlane.f32.xlu0 %v1597
      %v1599 = vpop.xlane.xlu0 %1598
      %v1600 = vmax.f32 %v1509, %v1511
      %1601 = vmax.xlane.f32.xlu0 %v1600
      %v1602 = vpop.xlane.xlu0 %1601
      %v1603 = vmax.f32 %v1515, %v1517
      %1604 = vmax.xlane.f32.xlu0 %v1603
      %v1605 = vpop.xlane.xlu0 %1604
      %v1606 = vmax.f32 %v1521, %v1523
      %1607 = vmax.xlane.f32.xlu0 %v1606
      %v1608 = vpop.xlane.xlu0 %1607
      %v1609 = vmax.f32 %v1527, %v1529
      %1610 = vmax.xlane.f32.xlu0 %v1609
      %v1611 = vpop.xlane.xlu0 %1610
      %v1612 = vmax.f32 %v1533, %v1535
      %1613 = vmax.xlane.f32.xlu0 %v1612
      %v1614 = vpop.xlane.xlu0 %1613
      %v1615 = vmax.f32 %v1539, %v1541
      %1616 = vmax.xlane.f32.xlu0 %v1615
      %v1617 = vpop.xlane.xlu0 %1616
      %v1618 = vmax.f32 %v1545, %v1547
      %1619 = vmax.xlane.f32.xlu0 %v1618
      %v1620 = vpop.xlane.xlu0 %1619
      %v1621 = vmax.f32 %v1551, %v1553
      %1622 = vmax.xlane.f32.xlu0 %v1621
      %v1623 = vpop.xlane.xlu0 %1622
      %v1624 = vmax.f32 %v1557, %v1559
      %1625 = vmax.xlane.f32.xlu0 %v1624
      %v1626 = vpop.xlane.xlu0 %1625
      %v1627 = vmax.f32 %v1563, %v1565
      %1628 = vmax.xlane.f32.xlu0 %v1627
      %v1629 = vpop.xlane.xlu0 %1628
      %v1630 = vmax.f32 %v1569, %v1571
      %1631 = vmax.xlane.f32.xlu0 %v1630
      %v1632 = vpop.xlane.xlu0 %1631
      %v1633 = vmax.f32 %v1575, %v1577
      %1634 = vmax.xlane.f32.xlu0 %v1633
      %v1635 = vpop.xlane.xlu0 %1634
      %v1636 = vmax.f32 %v1581, %v1583
      %1637 = vmax.xlane.f32.xlu0 %v1636
      %v1638 = vpop.xlane.xlu0 %1637
      %v1639 = vmax.f32 %v1587, %v1589
      %1640 = vmax.xlane.f32.xlu0 %v1639
      %v1641 = vpop.xlane.xlu0 %1640
      %v1642 = vmax.f32 %v1593, %v1595
      %1643 = vmax.xlane.f32.xlu0 %v1642
      %v1644 = vpop.xlane.xlu0 %1643
      %v1645 = vsub.f32 %v1503, %v1599
      %v1646 = vsub.f32 %v1505, %v1599
      %v1647 = vsub.f32 %v1509, %v1602
      %v1648 = vsub.f32 %v1511, %v1602
      %v1649 = vsub.f32 %v1515, %v1605
      %v1650 = vsub.f32 %v1517, %v1605
      %v1651 = vsub.f32 %v1521, %v1608
      %v1652 = vsub.f32 %v1523, %v1608
      %v1653 = vsub.f32 %v1527, %v1611
      %v1654 = vsub.f32 %v1529, %v1611
      %v1655 = vsub.f32 %v1533, %v1614
      %v1656 = vsub.f32 %v1535, %v1614
      %v1657 = vsub.f32 %v1539, %v1617
      %v1658 = vsub.f32 %v1541, %v1617
      %v1659 = vsub.f32 %v1545, %v1620
      %v1660 = vsub.f32 %v1547, %v1620
      %v1661 = vsub.f32 %v1551, %v1623
      %v1662 = vsub.f32 %v1553, %v1623
      %v1663 = vsub.f32 %v1557, %v1626
      %v1664 = vsub.f32 %v1559, %v1626
      %v1665 = vsub.f32 %v1563, %v1629
      %v1666 = vsub.f32 %v1565, %v1629
      %v1667 = vsub.f32 %v1569, %v1632
      %v1668 = vsub.f32 %v1571, %v1632
      %v1669 = vsub.f32 %v1575, %v1635
      %v1670 = vsub.f32 %v1577, %v1635
      %v1671 = vsub.f32 %v1581, %v1638
      %v1672 = vsub.f32 %v1583, %v1638
      %v1673 = vsub.f32 %v1587, %v1641
      %v1674 = vsub.f32 %v1589, %v1641
      %v1675 = vsub.f32 %v1593, %v1644
      %v1676 = vsub.f32 %v1595, %v1644
      %v1677 = vmul.f32 %v1645, 1.442695
      %v1678 = vpow.pop %v1677
      %v1679 = vmul.f32 %v1646, 1.442695
      %v1680 = vpow.pop %v1679
      %v1681 = vmul.f32 %v1647, 1.442695
      %v1682 = vpow.pop %v1681
      %v1683 = vmul.f32 %v1648, 1.442695
      %v1684 = vpow.pop %v1683
      %v1685 = vmul.f32 %v1649, 1.442695
      %v1686 = vpow.pop %v1685
      %v1687 = vmul.f32 %v1650, 1.442695
      %v1688 = vpow.pop %v1687
      %v1689 = vmul.f32 %v1651, 1.442695
      %v1690 = vpow.pop %v1689
      %v1691 = vmul.f32 %v1652, 1.442695
      %v1692 = vpow.pop %v1691
      %v1693 = vmul.f32 %v1653, 1.442695
      %v1694 = vpow.pop %v1693
      %v1695 = vmul.f32 %v1654, 1.442695
      %v1696 = vpow.pop %v1695
      %v1697 = vmul.f32 %v1655, 1.442695
      %v1698 = vpow.pop %v1697
      %v1699 = vmul.f32 %v1656, 1.442695
      %v1700 = vpow.pop %v1699
      %v1701 = vmul.f32 %v1657, 1.442695
      %v1702 = vpow.pop %v1701
      %v1703 = vmul.f32 %v1658, 1.442695
      %v1704 = vpow.pop %v1703
      %v1705 = vmul.f32 %v1659, 1.442695
      %v1706 = vpow.pop %v1705
      %v1707 = vmul.f32 %v1660, 1.442695
      %v1708 = vpow.pop %v1707
      %v1709 = vmul.f32 %v1661, 1.442695
      %v1710 = vpow.pop %v1709
      %v1711 = vmul.f32 %v1662, 1.442695
      %v1712 = vpow.pop %v1711
      %v1713 = vmul.f32 %v1663, 1.442695
      %v1714 = vpow.pop %v1713
      %v1715 = vmul.f32 %v1664, 1.442695
      %v1716 = vpow.pop %v1715
      %v1717 = vmul.f32 %v1665, 1.442695
      %v1718 = vpow.pop %v1717
      %v1719 = vmul.f32 %v1666, 1.442695
      %v1720 = vpow.pop %v1719
      %v1721 = vmul.f32 %v1667, 1.442695
      %v1722 = vpow.pop %v1721
      %v1723 = vmul.f32 %v1668, 1.442695
      %v1724 = vpow.pop %v1723
      %v1725 = vmul.f32 %v1669, 1.442695
      %v1726 = vpow.pop %v1725
      %v1727 = vmul.f32 %v1670, 1.442695
      %v1728 = vpow.pop %v1727
      %v1729 = vmul.f32 %v1671, 1.442695
      %v1730 = vpow.pop %v1729
      %v1731 = vmul.f32 %v1672, 1.442695
      %v1732 = vpow.pop %v1731
      %v1733 = vmul.f32 %v1673, 1.442695
      %v1734 = vpow.pop %v1733
      %v1735 = vmul.f32 %v1674, 1.442695
      %v1736 = vpow.pop %v1735
      %v1737 = vmul.f32 %v1675, 1.442695
      %v1738 = vpow.pop %v1737
      %v1739 = vmul.f32 %v1676, 1.442695
      %v1740 = vpow.pop %v1739
      %v1741 = vadd.f32 %v1678, %v1680
      %1742 = vadd.xlane.f32.xlu0 %v1741
      %v1743 = vpop.xlane.xlu0 %1742
      %v1744 = vadd.f32 %v1682, %v1684
      %1745 = vadd.xlane.f32.xlu0 %v1744
      %v1746 = vpop.xlane.xlu0 %1745
      %v1747 = vadd.f32 %v1686, %v1688
      %1748 = vadd.xlane.f32.xlu0 %v1747
      %v1749 = vpop.xlane.xlu0 %1748
      %v1750 = vadd.f32 %v1690, %v1692
      %1751 = vadd.xlane.f32.xlu0 %v1750
      %v1752 = vpop.xlane.xlu0 %1751
      %v1753 = vadd.f32 %v1694, %v1696
      %1754 = vadd.xlane.f32.xlu0 %v1753
      %v1755 = vpop.xlane.xlu0 %1754
      %v1756 = vadd.f32 %v1698, %v1700
      %1757 = vadd.xlane.f32.xlu0 %v1756
      %v1758 = vpop.xlane.xlu0 %1757
      %v1759 = vadd.f32 %v1702, %v1704
      %1760 = vadd.xlane.f32.xlu0 %v1759
      %v1761 = vpop.xlane.xlu0 %1760
      %v1762 = vadd.f32 %v1706, %v1708
      %1763 = vadd.xlane.f32.xlu0 %v1762
      %v1764 = vpop.xlane.xlu0 %1763
      %v1765 = vadd.f32 %v1710, %v1712
      %1766 = vadd.xlane.f32.xlu0 %v1765
      %v1767 = vpop.xlane.xlu0 %1766
      %v1768 = vadd.f32 %v1714, %v1716
      %1769 = vadd.xlane.f32.xlu0 %v1768
      %v1770 = vpop.xlane.xlu0 %1769
      %v1771 = vadd.f32 %v1718, %v1720
      %1772 = vadd.xlane.f32.xlu0 %v1771
      %v1773 = vpop.xlane.xlu0 %1772
      %v1774 = vadd.f32 %v1722, %v1724
      %1775 = vadd.xlane.f32.xlu0 %v1774
      %v1776 = vpop.xlane.xlu0 %1775
      %v1777 = vadd.f32 %v1726, %v1728
      %1778 = vadd.xlane.f32.xlu0 %v1777
      %v1779 = vpop.xlane.xlu0 %1778
      %v1780 = vadd.f32 %v1730, %v1732
      %1781 = vadd.xlane.f32.xlu0 %v1780
      %v1782 = vpop.xlane.xlu0 %1781
      %v1783 = vadd.f32 %v1734, %v1736
      %1784 = vadd.xlane.f32.xlu0 %v1783
      %v1785 = vpop.xlane.xlu0 %1784
      %v1786 = vadd.f32 %v1738, %v1740
      %1787 = vadd.xlane.f32.xlu0 %v1786
      %v1788 = vpop.xlane.xlu0 %1787
      %v1789 = vrcp.pop %v1743
      %v1790 = vrcp.pop %v1746
      %v1791 = vrcp.pop %v1749
      %v1792 = vrcp.pop %v1752
      %v1793 = vrcp.pop %v1755
      %v1794 = vrcp.pop %v1758
      %v1795 = vrcp.pop %v1761
      %v1796 = vrcp.pop %v1764
      %v1797 = vrcp.pop %v1767
      %v1798 = vrcp.pop %v1770
      %v1799 = vrcp.pop %v1773
      %v1800 = vrcp.pop %v1776
      %v1801 = vrcp.pop %v1779
      %v1802 = vrcp.pop %v1782
      %v1803 = vrcp.pop %v1785
      %v1804 = vrcp.pop %v1788
      %v1805 = vmul.f32 %v1678, %v1789
      %v1806 = vmul.f32 %v1680, %v1789
      %v1807 = vmul.f32 %v1682, %v1790
      %v1808 = vmul.f32 %v1684, %v1790
      %v1809 = vmul.f32 %v1686, %v1791
      %v1810 = vmul.f32 %v1688, %v1791
      %v1811 = vmul.f32 %v1690, %v1792
      %v1812 = vmul.f32 %v1692, %v1792
      %v1813 = vmul.f32 %v1694, %v1793
      %v1814 = vmul.f32 %v1696, %v1793
      %v1815 = vmul.f32 %v1698, %v1794
      %v1816 = vmul.f32 %v1700, %v1794
      %v1817 = vmul.f32 %v1702, %v1795
      %v1818 = vmul.f32 %v1704, %v1795
      %v1819 = vmul.f32 %v1706, %v1796
      %v1820 = vmul.f32 %v1708, %v1796
      %v1821 = vmul.f32 %v1710, %v1797
      %v1822 = vmul.f32 %v1712, %v1797
      %v1823 = vmul.f32 %v1714, %v1798
      %v1824 = vmul.f32 %v1716, %v1798
      %v1825 = vmul.f32 %v1718, %v1799
      %v1826 = vmul.f32 %v1720, %v1799
      %v1827 = vmul.f32 %v1722, %v1800
      %v1828 = vmul.f32 %v1724, %v1800
      %v1829 = vmul.f32 %v1726, %v1801
      %v1830 = vmul.f32 %v1728, %v1801
      %v1831 = vmul.f32 %v1730, %v1802
      %v1832 = vmul.f32 %v1732, %v1802
      %v1833 = vmul.f32 %v1734, %v1803
      %v1834 = vmul.f32 %v1736, %v1803
      %v1835 = vmul.f32 %v1738, %v1804
      %v1836 = vmul.f32 %v1740, %v1804
      %v1837 = vld [vmem:[#allocation3] sm:$0xff]
      %v1838 = vld [vmem:[#allocation3 + $0x8] sm:$0xff]
      %v1839 = vld [vmem:[#allocation3 + $0x10] sm:$0xff]
      %v1840 = vld [vmem:[#allocation3 + $0x18] sm:$0xff]
      %v1841 = vld [vmem:[#allocation3 + $0x20] sm:$0xff]
      %v1842 = vld [vmem:[#allocation3 + $0x28] sm:$0xff]
      %v1843 = vld [vmem:[#allocation3 + $0x30] sm:$0xff]
      %v1844 = vld [vmem:[#allocation3 + $0x38] sm:$0xff]
      %v1845 = vld [vmem:[#allocation3 + $0x40] sm:$0xff]
      %v1846 = vld [vmem:[#allocation3 + $0x48] sm:$0xff]
      %v1847 = vld [vmem:[#allocation3 + $0x50] sm:$0xff]
      %v1848 = vld [vmem:[#allocation3 + $0x58] sm:$0xff]
      %v1849 = vld [vmem:[#allocation3 + $0x60] sm:$0xff]
      %v1850 = vld [vmem:[#allocation3 + $0x68] sm:$0xff]
      %v1851 = vld [vmem:[#allocation3 + $0x70] sm:$0xff]
      %v1852 = vld [vmem:[#allocation3 + $0x78] sm:$0xff]
      %v1853 = vld [vmem:[#allocation3 + $0x80] sm:$0xff]
      %v1854 = vld [vmem:[#allocation3 + $0x88] sm:$0xff]
      %v1855 = vld [vmem:[#allocation3 + $0x90] sm:$0xff]
      %v1856 = vld [vmem:[#allocation3 + $0x98] sm:$0xff]
      %v1857 = vld [vmem:[#allocation3 + $0xa0] sm:$0xff]
      %v1858 = vld [vmem:[#allocation3 + $0xa8] sm:$0xff]
      %v1859 = vld [vmem:[#allocation3 + $0xb0] sm:$0xff]
      %v1860 = vld [vmem:[#allocation3 + $0xb8] sm:$0xff]
      %v1861 = vld [vmem:[#allocation3 + $0xc0] sm:$0xff]
      %v1862 = vld [vmem:[#allocation3 + $0xc8] sm:$0xff]
      %v1863 = vld [vmem:[#allocation3 + $0xd0] sm:$0xff]
      %v1864 = vld [vmem:[#allocation3 + $0xd8] sm:$0xff]
      %v1865 = vld [vmem:[#allocation3 + $0xe0] sm:$0xff]
      %v1866 = vld [vmem:[#allocation3 + $0xe8] sm:$0xff]
      %v1867 = vld [vmem:[#allocation3 + $0xf0] sm:$0xff]
      %v1868 = vld [vmem:[#allocation3 + $0xf8] sm:$0xff]
      %1869 = vmatprep.subr.mxu0 0.0
      %1870 = vmatpush1.msra.mxu0 %v1837
      %1871 = vmatprep.subr.mxu0 0.0
      %1872 = vmatpush1.msra.mxu0 %v1838
      %1873 = vmatprep.subr.mxu0 0.0
      %1874 = vmatpush1.msra.mxu0 %v1839
      %1875 = vmatprep.subr.mxu0 0.0
      %1876 = vmatpush1.msra.mxu0 %v1840
      %1877 = vmatprep.subr.mxu0 0.0
      %1878 = vmatpush1.msra.mxu0 %v1841
      %1879 = vmatprep.subr.mxu0 0.0
      %1880 = vmatpush1.msra.mxu0 %v1842
      %1881 = vmatprep.subr.mxu0 0.0
      %1882 = vmatpush1.msra.mxu0 %v1843
      %1883 = vmatprep.subr.mxu0 0.0
      %1884 = vmatpush1.msra.mxu0 %v1844
      %1885 = vmatprep.subr.mxu0 0.0
      %1886 = vmatpush1.msra.mxu0 %v1845
      %1887 = vmatprep.subr.mxu0 0.0
      %1888 = vmatpush1.msra.mxu0 %v1846
      %1889 = vmatprep.subr.mxu0 0.0
      %1890 = vmatpush1.msra.mxu0 %v1847
      %1891 = vmatprep.subr.mxu0 0.0
      %1892 = vmatpush1.msra.mxu0 %v1848
      %1893 = vmatprep.subr.mxu0 0.0
      %1894 = vmatpush1.msra.mxu0 %v1849
      %1895 = vmatprep.subr.mxu0 0.0
      %1896 = vmatpush1.msra.mxu0 %v1850
      %1897 = vmatprep.subr.mxu0 0.0
      %1898 = vmatpush1.msra.mxu0 %v1851
      %1899 = vmatprep.subr.mxu0 0.0
      %1900 = vmatpush1.msra.mxu0 %v1852
      %1901 = vmatprep.subr.mxu0 0.0
      %1902 = vmatpush1.msra.mxu0 %v1853
      %1903 = vmatprep.subr.mxu0 0.0
      %1904 = vmatpush1.msra.mxu0 %v1854
      %1905 = vmatprep.subr.mxu0 0.0
      %1906 = vmatpush1.msra.mxu0 %v1855
      %1907 = vmatprep.subr.mxu0 0.0
      %1908 = vmatpush1.msra.mxu0 %v1856
      %1909 = vmatprep.subr.mxu0 0.0
      %1910 = vmatpush1.msra.mxu0 %v1857
      %1911 = vmatprep.subr.mxu0 0.0
      %1912 = vmatpush1.msra.mxu0 %v1858
      %1913 = vmatprep.subr.mxu0 0.0
      %1914 = vmatpush1.msra.mxu0 %v1859
      %1915 = vmatprep.subr.mxu0 0.0
      %1916 = vmatpush1.msra.mxu0 %v1860
      %1917 = vmatprep.subr.mxu0 0.0
      %1918 = vmatpush1.msra.mxu0 %v1861
      %1919 = vmatprep.subr.mxu0 0.0
      %1920 = vmatpush1.msra.mxu0 %v1862
      %1921 = vmatprep.subr.mxu0 0.0
      %1922 = vmatpush1.msra.mxu0 %v1863
      %1923 = vmatprep.subr.mxu0 0.0
      %1924 = vmatpush1.msra.mxu0 %v1864
      %1925 = vmatprep.subr.mxu0 0.0
      %1926 = vmatpush1.msra.mxu0 %v1865
      %1927 = vmatprep.subr.mxu0 0.0
      %1928 = vmatpush1.msra.mxu0 %v1866
      %1929 = vmatprep.subr.mxu0 0.0
      %1930 = vmatpush1.msra.mxu0 %v1867
      %1931 = vmatprep.subr.mxu0 0.0
      %1932 = vmatpush1.msra.mxu0 %v1868
      %1933 = vmatprep.mubr.f32.mxu0 %v1806
      %1934 = vmatmul.mubr.f32.gmra.mrb[0].mxu0 %v1805
      %v1935 = vpop.f32.mrb[0].mxu0
      %v1936 = vadd.f32 0.0, %v1935
      %v1937 = vpop.f32.mrb[0].mxu0
      %1938 = vmatprep.mubr.f32.mxu0 %v1808
      %1939 = vmatmul.mubr.f32.gmra.mrb[0].mxu0 %v1807
      %v1940 = vpop.f32.mrb[0].mxu0
      %v1941 = vadd.f32 0.0, %v1940
      %v1942 = vpop.f32.mrb[0].mxu0
      %1943 = vmatprep.mubr.f32.mxu0 %v1810
      %1944 = vmatmul.mubr.f32.gmra.mrb[0].mxu0 %v1809
      %v1945 = vpop.f32.mrb[0].mxu0
      %v1946 = vadd.f32 0.0, %v1945
      %v1947 = vpop.f32.mrb[0].mxu0
      %1948 = vmatprep.mubr.f32.mxu0 %v1812
      %1949 = vmatmul.mubr.f32.gmra.mrb[0].mxu0 %v1811
      %v1950 = vpop.f32.mrb[0].mxu0
      %v1951 = vadd.f32 0.0, %v1950
      %v1952 = vpop.f32.mrb[0].mxu0
      %1953 = vmatprep.mubr.f32.mxu0 %v1814
      %1954 = vmatmul.mubr.f32.gmra.mrb[0].mxu0 %v1813
      %v1955 = vpop.f32.mrb[0].mxu0
      %v1956 = vadd.f32 0.0, %v1955
      %v1957 = vpop.f32.mrb[0].mxu0
      %1958 = vmatprep.mubr.f32.mxu0 %v1816
      %1959 = vmatmul.mubr.f32.gmra.mrb[0].mxu0 %v1815
      %v1960 = vpop.f32.mrb[0].mxu0
      %v1961 = vadd.f32 0.0, %v1960
      %v1962 = vpop.f32.mrb[0].mxu0
      %1963 = vmatprep.mubr.f32.mxu0 %v1818
      %1964 = vmatmul.mubr.f32.gmra.mrb[0].mxu0 %v1817
      %v1965 = vpop.f32.mrb[0].mxu0
      %v1966 = vadd.f32 0.0, %v1965
      %v1967 = vpop.f32.mrb[0].mxu0
      %1968 = vmatprep.mubr.f32.mxu0 %v1820
      %1969 = vmatmul.mubr.f32.gmra.mrb[0].mxu0 %v1819
      %v1970 = vpop.f32.mrb[0].mxu0
      %v1971 = vadd.f32 0.0, %v1970
      %v1972 = vpop.f32.mrb[0].mxu0
      %1973 = vmatprep.mubr.f32.mxu0 %v1822
      %1974 = vmatmul.mubr.f32.gmra.mrb[0].mxu0 %v1821
      %v1975 = vpop.f32.mrb[0].mxu0
      %v1976 = vadd.f32 0.0, %v1975
      %v1977 = vpop.f32.mrb[0].mxu0
      %1978 = vmatprep.mubr.f32.mxu0 %v1824
      %1979 = vmatmul.mubr.f32.gmra.mrb[0].mxu0 %v1823
      %v1980 = vpop.f32.mrb[0].mxu0
      %v1981 = vadd.f32 0.0, %v1980
      %v1982 = vpop.f32.mrb[0].mxu0
      %1983 = vmatprep.mubr.f32.mxu0 %v1826
      %1984 = vmatmul.mubr.f32.gmra.mrb[0].mxu0 %v1825
      %v1985 = vpop.f32.mrb[0].mxu0
      %v1986 = vadd.f32 0.0, %v1985
      %v1987 = vpop.f32.mrb[0].mxu0
      %1988 = vmatprep.mubr.f32.mxu0 %v1828
      %1989 = vmatmul.mubr.f32.gmra.mrb[0].mxu0 %v1827
      %v1990 = vpop.f32.mrb[0].mxu0
      %v1991 = vadd.f32 0.0, %v1990
      %v1992 = vpop.f32.mrb[0].mxu0
      %1993 = vmatprep.mubr.f32.mxu0 %v1830
      %1994 = vmatmul.mubr.f32.gmra.mrb[0].mxu0 %v1829
      %v1995 = vpop.f32.mrb[0].mxu0
      %v1996 = vadd.f32 0.0, %v1995
      %v1997 = vpop.f32.mrb[0].mxu0
      %1998 = vmatprep.mubr.f32.mxu0 %v1832
      %1999 = vmatmul.mubr.f32.gmra.mrb[0].mxu0 %v1831
      %v2000 = vpop.f32.mrb[0].mxu0
      %v2001 = vadd.f32 0.0, %v2000
      %v2002 = vpop.f32.mrb[0].mxu0
      %2003 = vmatprep.mubr.f32.mxu0 %v1834
      %2004 = vmatmul.mubr.f32.gmra.mrb[0].mxu0 %v1833
      %v2005 = vpop.f32.mrb[0].mxu0
      %v2006 = vadd.f32 0.0, %v2005
      %v2007 = vpop.f32.mrb[0].mxu0
      %2008 = vmatprep.mubr.f32.mxu0 %v1836
      %2009 = vmatmul.mubr.f32.gmra.mrb[0].mxu0 %v1835
      %v2010 = vpop.f32.mrb[0].mxu0
      %v2011 = vadd.f32 0.0, %v2010
      %v2012 = vpop.f32.mrb[0].mxu0
      %2013 = vdwg.mxu0
      %v2014 = vld [vmem:[%s7] sm:$0xff]
      %v2015 = vld [vmem:[%s7 + $0x8] sm:$0xff]
      %v2016 = vld [vmem:[%s7 + $0x10] sm:$0xff]
      %v2017 = vld [vmem:[%s7 + $0x18] sm:$0xff]
      %v2018 = vld [vmem:[%s7 + $0x20] sm:$0xff]
      %v2019 = vld [vmem:[%s7 + $0x28] sm:$0xff]
      %v2020 = vld [vmem:[%s7 + $0x30] sm:$0xff]
      %v2021 = vld [vmem:[%s7 + $0x38] sm:$0xff]
      %v2022 = vld [vmem:[%s8] sm:$0x1]
      %v2024 = vlaneseq
      %v2025 = vshrl.u32 %v2024, 7
      %v2026 = vsub.s32 0, %v2025
      %v2027 = vrot.slane %v2022, %v2026
      %v2030 = vsel %vm1066, %v1936, 0
      %v2033 = vsel %vm1066, %v1941, 0
      %v2036 = vsel %vm1066, %v1946, 0
      %v2039 = vsel %vm1066, %v1951, 0
      %v2042 = vsel %vm1066, %v1956, 0
      %v2045 = vsel %vm1066, %v1961, 0
      %v2048 = vsel %vm1066, %v1966, 0
      %v2051 = vsel %vm1066, %v1971, 0
      %v2054 = vsel %vm1066, %v1976, 0
      %v2057 = vsel %vm1066, %v1981, 0
      %v2060 = vsel %vm1066, %v1986, 0
      %v2063 = vsel %vm1066, %v1991, 0
      %v2066 = vsel %vm1066, %v1996, 0
      %v2069 = vsel %vm1066, %v2001, 0
      %v2072 = vsel %vm1066, %v2006, 0
      %v2075 = vsel %vm1066, %v2011, 0
      %2077 = vmatprep.subr.mxu0 0.0
      %2078 = vmatpush1.msra.mxu0 %v2014
      %2079 = vmatprep.subr.mxu0 0.0
      %2080 = vmatpush1.msra.mxu0 %v2015
      %2081 = vmatprep.subr.mxu0 0.0
      %2082 = vmatpush1.msra.mxu0 %v2016
      %2083 = vmatprep.subr.mxu0 0.0
      %2084 = vmatpush1.msra.mxu0 %v2017
      %2085 = vmatprep.subr.mxu0 0.0
      %2086 = vmatpush1.msra.mxu0 %v2018
      %2087 = vmatprep.subr.mxu0 0.0
      %2088 = vmatpush1.msra.mxu0 %v2019
      %2089 = vmatprep.subr.mxu0 0.0
      %2090 = vmatpush1.msra.mxu0 %v2020
      %2091 = vmatprep.subr.mxu0 0.0
      %2092 = vmatpush1.msra.mxu0 %v2021
      %2093 = vmatprep.subr.mxu0 0.0
      %2094 = vmatpush1.msra.mxu0 0.0
      %2095 = vmatprep.subr.mxu0 0.0
      %2096 = vmatpush1.msra.mxu0 0.0
      %2097 = vmatprep.subr.mxu0 0.0
      %2098 = vmatpush1.msra.mxu0 0.0
      %2099 = vmatprep.subr.mxu0 0.0
      %2100 = vmatpush1.msra.mxu0 0.0
      %2101 = vmatprep.subr.mxu0 0.0
      %2102 = vmatpush1.msra.mxu0 0.0
      %2103 = vmatprep.subr.mxu0 0.0
      %2104 = vmatpush1.msra.mxu0 0.0
      %2105 = vmatprep.subr.mxu0 0.0
      %2106 = vmatpush1.msra.mxu0 0.0
      %2107 = vmatprep.subr.mxu0 0.0
      %2108 = vmatpush1.msra.mxu0 0.0
      %2109 = vmatprep.subr.mxu0 0.0
      %2110 = vmatpush1.msra.mxu0 0.0
      %2111 = vmatprep.subr.mxu0 0.0
      %2112 = vmatpush1.msra.mxu0 0.0
      %2113 = vmatprep.subr.mxu0 0.0
      %2114 = vmatpush1.msra.mxu0 0.0
      %2115 = vmatprep.subr.mxu0 0.0
      %2116 = vmatpush1.msra.mxu0 0.0
      %2117 = vmatprep.subr.mxu0 0.0
      %2118 = vmatpush1.msra.mxu0 0.0
      %2119 = vmatprep.subr.mxu0 0.0
      %2120 = vmatpush1.msra.mxu0 0.0
      %2121 = vmatprep.subr.mxu0 0.0
      %2122 = vmatpush1.msra.mxu0 0.0
      %2123 = vmatprep.subr.mxu0 0.0
      %2124 = vmatpush1.msra.mxu0 0.0
      %2125 = vmatprep.subr.mxu0 0.0
      %2126 = vmatpush1.msra.mxu0 0.0
      %2127 = vmatprep.subr.mxu0 0.0
      %2128 = vmatpush1.msra.mxu0 0.0
      %2129 = vmatprep.subr.mxu0 0.0
      %2130 = vmatpush1.msra.mxu0 0.0
      %2131 = vmatprep.subr.mxu0 0.0
      %2132 = vmatpush1.msra.mxu0 0.0
      %2133 = vmatprep.subr.mxu0 0.0
      %2134 = vmatpush1.msra.mxu0 0.0
      %2135 = vmatprep.subr.mxu0 0.0
      %2136 = vmatpush1.msra.mxu0 0.0
      %2137 = vmatprep.subr.mxu0 0.0
      %2138 = vmatpush1.msra.mxu0 0.0
      %2139 = vmatprep.subr.mxu0 0.0
      %2140 = vmatpush1.msra.mxu0 0.0
      %2141 = vmatprep.mubr.f32.mxu0 0.0
      %2142 = vmatmul.mubr.f32.gmra.mrb[0].mxu0 %v2030
      %v2143 = vpop.f32.mrb[0].mxu0
      %v2144 = vadd.f32 %v2027, %v2143
      %v2145 = vpop.f32.mrb[0].mxu0
      %2146 = vmatprep.mubr.f32.mxu0 0.0
      %2147 = vmatmul.mubr.f32.gmra.mrb[0].mxu0 %v2033
      %v2148 = vpop.f32.mrb[0].mxu0
      %v2149 = vadd.f32 %v2027, %v2148
      %v2150 = vpop.f32.mrb[0].mxu0
      %2151 = vmatprep.mubr.f32.mxu0 0.0
      %2152 = vmatmul.mubr.f32.gmra.mrb[0].mxu0 %v2036
      %v2153 = vpop.f32.mrb[0].mxu0
      %v2154 = vadd.f32 %v2027, %v2153
      %v2155 = vpop.f32.mrb[0].mxu0
      %2156 = vmatprep.mubr.f32.mxu0 0.0
      %2157 = vmatmul.mubr.f32.gmra.mrb[0].mxu0 %v2039
      %v2158 = vpop.f32.mrb[0].mxu0
      %v2159 = vadd.f32 %v2027, %v2158
      %v2160 = vpop.f32.mrb[0].mxu0
      %2161 = vmatprep.mubr.f32.mxu0 0.0
      %2162 = vmatmul.mubr.f32.gmra.mrb[0].mxu0 %v2042
      %v2163 = vpop.f32.mrb[0].mxu0
      %v2164 = vadd.f32 %v2027, %v2163
      %v2165 = vpop.f32.mrb[0].mxu0
      %2166 = vmatprep.mubr.f32.mxu0 0.0
      %2167 = vmatmul.mubr.f32.gmra.mrb[0].mxu0 %v2045
      %v2168 = vpop.f32.mrb[0].mxu0
      %v2169 = vadd.f32 %v2027, %v2168
      %v2170 = vpop.f32.mrb[0].mxu0
      %2171 = vmatprep.mubr.f32.mxu0 0.0
      %2172 = vmatmul.mubr.f32.gmra.mrb[0].mxu0 %v2048
      %v2173 = vpop.f32.mrb[0].mxu0
      %v2174 = vadd.f32 %v2027, %v2173
      %v2175 = vpop.f32.mrb[0].mxu0
      %2176 = vmatprep.mubr.f32.mxu0 0.0
      %2177 = vmatmul.mubr.f32.gmra.mrb[0].mxu0 %v2051
      %v2178 = vpop.f32.mrb[0].mxu0
      %v2179 = vadd.f32 %v2027, %v2178
      %v2180 = vpop.f32.mrb[0].mxu0
      %2181 = vmatprep.mubr.f32.mxu0 0.0
      %2182 = vmatmul.mubr.f32.gmra.mrb[0].mxu0 %v2054
      %v2183 = vpop.f32.mrb[0].mxu0
      %v2184 = vadd.f32 %v2027, %v2183
      %v2185 = vpop.f32.mrb[0].mxu0
      %2186 = vmatprep.mubr.f32.mxu0 0.0
      %2187 = vmatmul.mubr.f32.gmra.mrb[0].mxu0 %v2057
      %v2188 = vpop.f32.mrb[0].mxu0
      %v2189 = vadd.f32 %v2027, %v2188
      %v2190 = vpop.f32.mrb[0].mxu0
      %2191 = vmatprep.mubr.f32.mxu0 0.0
      %2192 = vmatmul.mubr.f32.gmra.mrb[0].mxu0 %v2060
      %v2193 = vpop.f32.mrb[0].mxu0
      %v2194 = vadd.f32 %v2027, %v2193
      %v2195 = vpop.f32.mrb[0].mxu0
      %2196 = vmatprep.mubr.f32.mxu0 0.0
      %2197 = vmatmul.mubr.f32.gmra.mrb[0].mxu0 %v2063
      %v2198 = vpop.f32.mrb[0].mxu0
      %v2199 = vadd.f32 %v2027, %v2198
      %v2200 = vpop.f32.mrb[0].mxu0
      %2201 = vmatprep.mubr.f32.mxu0 0.0
      %2202 = vmatmul.mubr.f32.gmra.mrb[0].mxu0 %v2066
      %v2203 = vpop.f32.mrb[0].mxu0
      %v2204 = vadd.f32 %v2027, %v2203
      %v2205 = vpop.f32.mrb[0].mxu0
      %2206 = vmatprep.mubr.f32.mxu0 0.0
      %2207 = vmatmul.mubr.f32.gmra.mrb[0].mxu0 %v2069
      %v2208 = vpop.f32.mrb[0].mxu0
      %v2209 = vadd.f32 %v2027, %v2208
      %v2210 = vpop.f32.mrb[0].mxu0
      %2211 = vmatprep.mubr.f32.mxu0 0.0
      %2212 = vmatmul.mubr.f32.gmra.mrb[0].mxu0 %v2072
      %v2213 = vpop.f32.mrb[0].mxu0
      %v2214 = vadd.f32 %v2027, %v2213
      %v2215 = vpop.f32.mrb[0].mxu0
      %2216 = vmatprep.mubr.f32.mxu0 0.0
      %2217 = vmatmul.mubr.f32.gmra.mrb[0].mxu0 %v2075
      %v2218 = vpop.f32.mrb[0].mxu0
      %v2219 = vadd.f32 %v2027, %v2218
      %v2220 = vpop.f32.mrb[0].mxu0
      %2221 = vdwg.mxu0
      %v2222 = vadd.f32 %v2144, %v1035
      %v2223 = vadd.f32 %v2149, %v1036
      %v2224 = vadd.f32 %v2154, %v1037
      %v2225 = vadd.f32 %v2159, %v1038
      %v2226 = vadd.f32 %v2164, %v1039
      %v2227 = vadd.f32 %v2169, %v1040
      %v2228 = vadd.f32 %v2174, %v1041
      %v2229 = vadd.f32 %v2179, %v1042
      %v2230 = vadd.f32 %v2184, %v1043
      %v2231 = vadd.f32 %v2189, %v1044
      %v2232 = vadd.f32 %v2194, %v1045
      %v2233 = vadd.f32 %v2199, %v1046
      %v2234 = vadd.f32 %v2204, %v1047
      %v2235 = vadd.f32 %v2209, %v1048
      %v2236 = vadd.f32 %v2214, %v1049
      %v2237 = vadd.f32 %v2219, %v1050
      %2238 = vst.msk [vmem:[%s354] sm:$0xff] %vm1066, %v2222
      %2239 = vst.msk [vmem:[%s354 + $0x8] sm:$0xff] %vm1066, %v2223
      %2240 = vst.msk [vmem:[%s354 + $0x10] sm:$0xff] %vm1066, %v2224
      %2241 = vst.msk [vmem:[%s354 + $0x18] sm:$0xff] %vm1066, %v2225
      %2242 = vst.msk [vmem:[%s354 + $0x20] sm:$0xff] %vm1066, %v2226
      %2243 = vst.msk [vmem:[%s354 + $0x28] sm:$0xff] %vm1066, %v2227
      %2244 = vst.msk [vmem:[%s354 + $0x30] sm:$0xff] %vm1066, %v2228
      %2245 = vst.msk [vmem:[%s354 + $0x38] sm:$0xff] %vm1066, %v2229
      %2246 = vst.msk [vmem:[%s354 + $0x40] sm:$0xff] %vm1066, %v2230
      %2247 = vst.msk [vmem:[%s354 + $0x48] sm:$0xff] %vm1066, %v2231
      %2248 = vst.msk [vmem:[%s354 + $0x50] sm:$0xff] %vm1066, %v2232
      %2249 = vst.msk [vmem:[%s354 + $0x58] sm:$0xff] %vm1066, %v2233
      %2250 = vst.msk [vmem:[%s354 + $0x60] sm:$0xff] %vm1066, %v2234
      %2251 = vst.msk [vmem:[%s354 + $0x68] sm:$0xff] %vm1066, %v2235
      %2252 = vst.msk [vmem:[%s354 + $0x70] sm:$0xff] %vm1066, %v2236
      %2253 = vst.msk [vmem:[%s354 + $0x78] sm:$0xff] %vm1066, %v2237
      %s2254 = smul.u32 16, %s25
      %p2255 = scmp.lt.s32.totalorder %s24, 1
      %s2256 = scalar_select %p2255, %s24, 1
      %p2257 = scmp.lt.s32.totalorder %s2254, 31
      %s2258 = scalar_select %p2257, %s2254, 31
      %s2259 = smul.addr %s2256, 32
      %s2260 = sadd.s32 %s2258, %s2259
      %s2261 = smul.addr %s2260, 8
      %s2262 = scalar_lea.vmem %s9, %s2261
      // Predicated region
      $region61: #{tpu_custom_call.1} parent=55 // pred_check
        %p2263 = pneg %p246
      $region62: #{tpu_custom_call.1} parent=55 // pred_check_branch
        %2265 = sbr.rel (%p2263) target = $region64
      $region63: #{tpu_custom_call.1} parent=55 // pred_region
        %s2266 = smul.u32 16, %s25
      $region64: #{tpu_custom_call.1} parent=55 // pred_fallthru
        _
    $region56: #{tpu_custom_call.1} parent=5 // pred_fallthru
      _
    %p2267 = scmp.le.s32.totalorder 2, %s15
    // Predicated region
    $region65: #{tpu_custom_call.1} parent=5 // pred_check
      %p2268 = pneg %p2267
    $region66: #{tpu_custom_call.1} parent=5 // pred_check_branch
      %2270 = sbr.rel (%p2268) target = $region68
    $region67: #{tpu_custom_call.1} parent=5 // pred_region
      %s2271 = ssub.s32 %s15, 2
      // Predicated region
      $region69: #{tpu_custom_call.1} parent=67 // pred_check
        %p2272 = pneg %p252
      $region70: #{tpu_custom_call.1} parent=67 // pred_check_branch
        %2274 = sbr.rel (%p2272) target = $region72
      $region71: #{tpu_custom_call.1} parent=67 // pred_region
        %s2275 = smul.u32 16, %s27
        %p2276 = scmp.lt.s32.totalorder %s26, 1
        %s2277 = scalar_select %p2276, %s26, 1
        %p2278 = scmp.lt.s32.totalorder %s2275, 31
        %s2279 = scalar_select %p2278, %s2275, 31
        %s2280 = smul.addr %s2277, 32
        %s2281 = sadd.s32 %s2279, %s2280
        %s2282 = smul.addr %s2281, 8
        %s2283 = scalar_lea.vmem %s9, %s2282
      $region72: #{tpu_custom_call.1} parent=67 // pred_fallthru
        _
    $region68: #{tpu_custom_call.1} parent=5 // pred_fallthru
      _
  $region6: #{tpu_custom_call.1} parent=0 // loop_footer
    %s19 = sadd.s32 1, %s15
  $region7: #{tpu_custom_call.1} parent=0 // loop_footer_branch
    %14 = sbr.rel target = $region3
  $region8: #{tpu_custom_call.1} parent=0 // loop_exit
    _

</llo_original>
